<compile_context>
chip_gen: v6e
topology: v6e:2x2x1
jax: 0.10.0
libtpu: 0.0.40
codegen_flags: <defaults>
</compile_context>

<pallas_src>
import math
import functools

import jax
import jax.numpy as jnp
import numpy as np
from jax import lax
from jax.experimental import pallas as pl
from jax.experimental.pallas import tpu as pltpu


def _mha_kernel(x_ref, wqkv_ref, bqkv_ref, wo_ref, bo_ref, o_ref, attn_ref, *,
                num_heads):
    # x_ref:    (Bt, S, 3E)   concatenated [queries | keys | values]
    # wqkv_ref: (3E, 3E)      block-diagonal fused projection weight
    # bqkv_ref: (1, 3E)       fused projection bias (f32, scale folded into bq)
    # wo_ref:   (E, E)        output projection weight (already (in, out))
    # bo_ref:   (1, E)        output projection bias (f32)
    # o_ref:    (Bt, S, E)
    # attn_ref: (Bt, S, E)    f32 VMEM scratch holding concatenated head outputs
    Bt, S, E3 = x_ref.shape
    E = E3 // 3
    D = E // num_heads
    mdt = wqkv_ref.dtype  # matmul operand dtype (f32, or bf16 on v6e/v7x)

    # Fused Q/K/V projections: one (Bt*S, 3E) x (3E, 3E) MXU pass.
    # (reshape only merges leading dims -> no relayout)
    x2d = x_ref[...].reshape(Bt * S, E3).astype(mdt)
    proj = jnp.dot(x2d, wqkv_ref[...],
                   preferred_element_type=jnp.float32) + bqkv_ref[...]
    proj = proj.reshape(Bt, S, E3)          # split leading dim only

    q = proj[:, :, 0:E]                     # already carries 1/sqrt(D) scale
    k = proj[:, :, E:2 * E]
    v = proj[:, :, 2 * E:3 * E]

    # Per-head scaled dot-product attention, batched over Bt (softmax in f32).
    for h in range(num_heads):
        qh = q[:, :, h * D:(h + 1) * D].astype(mdt)     # (Bt, S, D)
        kh = k[:, :, h * D:(h + 1) * D].astype(mdt)     # (Bt, S, D)
        vh = v[:, :, h * D:(h + 1) * D].astype(mdt)     # (Bt, S, D)
        scores = jnp.einsum('bqd,bkd->bqk', qh, kh,     # (Bt, S, S)
                            preferred_element_type=jnp.float32)
        m = jnp.max(scores, axis=-1, keepdims=True)
        p = jnp.exp(scores - m)
        p = p * pl.reciprocal(jnp.sum(p, axis=-1, keepdims=True), approx=True)
        attn_ref[:, :, h * D:(h + 1) * D] = jnp.einsum(
            'bqk,bkd->bqd', p.astype(mdt), vh,
            preferred_element_type=jnp.float32)

    # Output projection off the lane-resident scratch: (Bt*S, E) x (E, E).
    attn = attn_ref[...].reshape(Bt * S, E).astype(mdt)
    out = jnp.dot(attn, wo_ref[...],
                  preferred_element_type=jnp.float32) + bo_ref[...]
    o_ref[...] = out.reshape(Bt, S, E).astype(o_ref.dtype)


def _pick_batch_tile(B, S):
    """Largest divisor of B such that Bt*S targets >= ~128 MXU rows."""
    target = max(1, 128 // S)
    bt = 1
    for cand in range(1, B + 1):
        if B % cand == 0 and cand <= target:
            bt = cand
    return bt


def multi_headed_attention(queries, keys, values, params, num_heads, *,
                           matmul_dtype=None, batch_tile=None):
    """params: dict with Wq,bq,Wk,bk,Wv,bv,Wo,bo (W* in torch (out,in) layout).

    matmul_dtype: optional dtype for matmul operands (e.g. jnp.bfloat16 on
    v6e/v7x). Softmax / accumulation / biases stay in float32 regardless.
    """
    B, S, E = queries.shape
    assert E % num_heads == 0
    D = E // num_heads
    scale = 1.0 / math.sqrt(D)  # ScaledDotProduct gets embed_len=head_length -> dk=D
    E3 = 3 * E
    w_dtype = queries.dtype if matmul_dtype is None else matmul_dtype

    # --- wrapper-side weight prep (layout plumbing, not compute hoisting) ---
    # Block-diagonal fused QKV weight, with the 1/sqrt(D) scale folded into
    # the Q block and q-bias.
    w_qkv = jnp.zeros((E3, E3), jnp.float32)
    w_qkv = w_qkv.at[0:E, 0:E].set(params["Wq"].T * scale)
    w_qkv = w_qkv.at[E:2 * E, E:2 * E].set(params["Wk"].T)
    w_qkv = w_qkv.at[2 * E:, 2 * E:].set(params["Wv"].T)
    w_qkv = w_qkv.astype(w_dtype)
    b_qkv = jnp.concatenate(
        [params["bq"] * scale, params["bk"], params["bv"]]
    ).reshape(1, E3).astype(jnp.float32)
    w_o = params["Wo"].T.astype(w_dtype)
    b_o = params["bo"].reshape(1, E).astype(jnp.float32)

    # Concatenate inputs along the feature dim to feed the fused projection.
    x = jnp.concatenate([queries, keys, values], axis=-1)  # (B, S, 3E)

    if batch_tile is None:
        batch_tile = _pick_batch_tile(B, S)
    Bt = batch_tile
    assert B % Bt == 0

    kernel = functools.partial(_mha_kernel, num_heads=num_heads)

    return pl.pallas_call(
        kernel,
        out_shape=jax.ShapeDtypeStruct((B, S, E), queries.dtype),
        grid_spec=pltpu.PrefetchScalarGridSpec(
            num_scalar_prefetch=0,
            grid=(B // Bt,),
            in_specs=[
                pl.BlockSpec((Bt, S, E3), lambda b: (b, 0, 0)),   # x
                pl.BlockSpec((E3, E3), lambda b: (0, 0)),         # Wqkv (block-diag)
                pl.BlockSpec((1, E3), lambda b: (0, 0)),          # bqkv
                pl.BlockSpec((E, E), lambda b: (0, 0)),           # Wo
                pl.BlockSpec((1, E), lambda b: (0, 0)),           # bo
            ],
            out_specs=pl.BlockSpec((Bt, S, E), lambda b: (b, 0, 0)),
            scratch_shapes=[pltpu.VMEM((Bt, S, E), jnp.float32)],
        ),
        compiler_params=pltpu.CompilerParams(
            dimension_semantics=("parallel",),   # shards batch tiles across TCs
            vmem_limit_bytes=32 * 1024 * 1024,
        ),
    )(x, w_qkv, b_qkv, w_o, b_o)


def _reference(queries, keys, values, params, num_heads):
    """Pure-JAX reproduction of the PyTorch forward for verification."""
    B, S, E = queries.shape
    D = E // num_heads

    def lin(x, W, b):
        return x @ W.T + b

    def split_heads(x):
        return x.reshape(B, S, num_heads, D).transpose(0, 2, 1, 3)  # (B, H, S, D)

    q = split_heads(lin(queries, params["Wq"], params["bq"]))
    k = split_heads(lin(keys, params["Wk"], params["bk"]))
    v = split_heads(lin(values, params["Wv"], params["bv"]))

    scores = jnp.einsum("bhqd,bhkd->bhqk", q, k) / math.sqrt(D)
    p = jax.nn.softmax(scores, axis=-1)
    o = jnp.einsum("bhqk,bhkd->bhqd", p, v)
    o = o.transpose(0, 2, 1, 3).reshape(B, S, E)
    return lin(o, params["Wo"], params["bo"])


if __name__ == "__main__":
    embed_len = 64
    num_heads = 4
    batch_size = 2
    seq_len = 8

    key = jax.random.PRNGKey(0)
    keys_ = jax.random.split(key, 12)

    # Deterministic parameter init (uniform +-1/sqrt(fan_in), like nn.Linear).
    bound = 1.0 / math.sqrt(embed_len)

    def u(k, shape):
        return jax.random.uniform(k, shape, jnp.float32, -bound, bound)

    params = {
        "Wq": u(keys_[0], (embed_len, embed_len)), "bq": u(keys_[1], (embed_len,)),
        "Wk": u(keys_[2], (embed_len, embed_len)), "bk": u(keys_[3], (embed_len,)),
        "Wv": u(keys_[4], (embed_len, embed_len)), "bv": u(keys_[5], (embed_len,)),
        "Wo": u(keys_[6], (embed_len, embed_len)), "bo": u(keys_[7], (embed_len,)),
    }

    queries = jax.random.normal(keys_[8], (batch_size, seq_len, embed_len), jnp.float32)
    keys_in = jax.random.normal(keys_[9], (batch_size, seq_len, embed_len), jnp.float32)
    values = jax.random.normal(keys_[10], (batch_size, seq_len, embed_len), jnp.float32)

    ref = _reference(queries, keys_in, values, params, num_heads)

    # f32 matmul-operand path (matches module semantics; approx reciprocal only).
    out = multi_headed_attention(queries, keys_in, values, params, num_heads)
    out = jax.block_until_ready(out)
    assert out.shape == (batch_size, seq_len, embed_len)
    assert np.allclose(np.asarray(out), np.asarray(ref), atol=5e-3, rtol=5e-3), (
        "Pallas (f32) output mismatch vs JAX reference"
    )

    # bf16 matmul-operand path (v6e/v7x MXU); softmax stays f32 -> loose tolerance.
    out_bf16 = multi_headed_attention(queries, keys_in, values, params, num_heads,
                                      matmul_dtype=jnp.bfloat16)
    out_bf16 = jax.block_until_ready(out_bf16)
    assert np.allclose(np.asarray(out_bf16), np.asarray(ref), atol=5e-2, rtol=5e-2), (
        "Pallas (bf16 matmul) output mismatch vs JAX reference"
    )

    print("KERNEL_OK")
</pallas_src>

<mosaic_0001>
module attributes {stable_mosaic.version = 11 : i64} {
  func.func @_mha_kernel(%arg0: i32, %arg1: memref<2x8x192xf32, #tpu.memory_space<vmem>>, %arg2: memref<192x192xf32, #tpu.memory_space<vmem>>, %arg3: memref<1x192xf32, #tpu.memory_space<vmem>>, %arg4: memref<64x64xf32, #tpu.memory_space<vmem>>, %arg5: memref<1x64xf32, #tpu.memory_space<vmem>>, %arg6: memref<2x8x64xf32, #tpu.memory_space<vmem>>, %arg7: memref<2x8x64xf32, #tpu.memory_space<vmem>>) attributes {dimension_semantics = [#tpu.dimension_semantics<parallel>], iteration_bounds = array<i64: 1>, scalar_prefetch = 0 : i64, scratch_operands = 1 : i64, tpu.core_type = #tpu.core_type<tc>, window_params = [{transform_indices = @transform_0, window_bounds = array<i64: 2, 8, 192>}, {pipeline_mode = #tpu.pipeline_mode<synchronous>, transform_indices = @transform_1, window_bounds = array<i64: 192, 192>}, {pipeline_mode = #tpu.pipeline_mode<synchronous>, transform_indices = @transform_2, window_bounds = array<i64: 1, 192>}, {pipeline_mode = #tpu.pipeline_mode<synchronous>, transform_indices = @transform_3, window_bounds = array<i64: 64, 64>}, {pipeline_mode = #tpu.pipeline_mode<synchronous>, transform_indices = @transform_4, window_bounds = array<i64: 1, 64>}, {transform_indices = @transform_5, window_bounds = array<i64: 2, 8, 64>}]} {
    %c0 = arith.constant 0 : index
    %c0_0 = arith.constant 0 : index
    %c0_1 = arith.constant 0 : index
    %0 = vector.load %arg1[%c0, %c0_0, %c0_1] : memref<2x8x192xf32, #tpu.memory_space<vmem>>, vector<2x8x192xf32>
    %1 = vector.shape_cast %0 : vector<2x8x192xf32> to vector<16x192xf32>
    %c0_2 = arith.constant 0 : index
    %c0_3 = arith.constant 0 : index
    %2 = vector.load %arg2[%c0_2, %c0_3] : memref<192x192xf32, #tpu.memory_space<vmem>>, vector<192x192xf32>
    %cst = arith.constant dense<0.000000e+00> : vector<16x192xf32>
    %3 = tpu.matmul %1, %2, %cst {dimension_numbers = #tpu.dot_dimension_numbers<[1], [0], [0], [1], [0, 0, 1, 1], [], []>} : vector<16x192xf32>, vector<192x192xf32>, vector<16x192xf32> -> vector<16x192xf32>
    %c0_4 = arith.constant 0 : index
    %c0_5 = arith.constant 0 : index
    %4 = vector.load %arg3[%c0_4, %c0_5] : memref<1x192xf32, #tpu.memory_space<vmem>>, vector<1x192xf32>
    %5 = vector.broadcast %4 : vector<1x192xf32> to vector<16x192xf32>
    %6 = arith.addf %3, %5 : vector<16x192xf32>
    %7 = vector.shape_cast %6 : vector<16x192xf32> to vector<2x8x192xf32>
    %8 = vector.extract_strided_slice %7 {offsets = [0, 0, 0], sizes = [2, 8, 64], strides = [1, 1, 1]} : vector<2x8x192xf32> to vector<2x8x64xf32>
    %9 = vector.extract_strided_slice %7 {offsets = [0, 0, 64], sizes = [2, 8, 64], strides = [1, 1, 1]} : vector<2x8x192xf32> to vector<2x8x64xf32>
    %10 = vector.extract_strided_slice %7 {offsets = [0, 0, 128], sizes = [2, 8, 64], strides = [1, 1, 1]} : vector<2x8x192xf32> to vector<2x8x64xf32>
    %11 = vector.extract_strided_slice %8 {offsets = [0, 0, 0], sizes = [2, 8, 16], strides = [1, 1, 1]} : vector<2x8x64xf32> to vector<2x8x16xf32>
    %12 = vector.extract_strided_slice %9 {offsets = [0, 0, 0], sizes = [2, 8, 16], strides = [1, 1, 1]} : vector<2x8x64xf32> to vector<2x8x16xf32>
    %13 = vector.extract_strided_slice %10 {offsets = [0, 0, 0], sizes = [2, 8, 16], strides = [1, 1, 1]} : vector<2x8x64xf32> to vector<2x8x16xf32>
    "tpu.trace_start"() <{level = 10 : i32, message = "bqd,bkd->bqk"}> : () -> ()
    %cst_6 = arith.constant dense<0.000000e+00> : vector<2x8x8xf32>
    %14 = tpu.matmul %11, %12, %cst_6 {dimension_numbers = #tpu.dot_dimension_numbers<[2], [2], [1], [1], [0, 0, 0, 1, 1, 1], [0], [0]>} : vector<2x8x16xf32>, vector<2x8x16xf32>, vector<2x8x8xf32> -> vector<2x8x8xf32>
    "tpu.trace_stop"() : () -> ()
    %cst_7 = arith.constant dense<0xFF800000> : vector<2x8xf32>
    %15 = vector.multi_reduction <maximumf>, %14, %cst_7 [2] : vector<2x8x8xf32> to vector<2x8xf32>
    %16 = vector.shape_cast %15 : vector<2x8xf32> to vector<2x8x1xf32>
    %17 = vector.broadcast %16 : vector<2x8x1xf32> to vector<2x8x8xf32>
    %18 = arith.subf %14, %17 : vector<2x8x8xf32>
    %19 = math.exp %18 : vector<2x8x8xf32>
    %cst_8 = arith.constant dense<0.000000e+00> : vector<2x8xf32>
    %20 = vector.multi_reduction <add>, %19, %cst_8 [2] : vector<2x8x8xf32> to vector<2x8xf32>
    %21 = vector.shape_cast %20 : vector<2x8xf32> to vector<2x8x1xf32>
    %22 = tpu.reciprocal %21 {approx = true} : vector<2x8x1xf32> -> vector<2x8x1xf32>
    %23 = vector.broadcast %22 : vector<2x8x1xf32> to vector<2x8x8xf32>
    %24 = arith.mulf %19, %23 : vector<2x8x8xf32>
    "tpu.trace_start"() <{level = 10 : i32, message = "bqk,bkd->bqd"}> : () -> ()
    %cst_9 = arith.constant dense<0.000000e+00> : vector<2x8x16xf32>
    %25 = tpu.matmul %24, %13, %cst_9 {dimension_numbers = #tpu.dot_dimension_numbers<[2], [1], [1], [2], [0, 0, 0, 1, 1, 2], [0], [0]>} : vector<2x8x8xf32>, vector<2x8x16xf32>, vector<2x8x16xf32> -> vector<2x8x16xf32>
    "tpu.trace_stop"() : () -> ()
    %c0_10 = arith.constant 0 : index
    %c0_11 = arith.constant 0 : index
    %c0_12 = arith.constant 0 : index
    %26 = vector.load %arg7[%c0_10, %c0_11, %c0_12] : memref<2x8x64xf32, #tpu.memory_space<vmem>>, vector<2x8x16xf32>
    tpu.vector_store %arg7[%c0_10, %c0_11, %c0_12], %25 {strides = array<i32>} : memref<2x8x64xf32, #tpu.memory_space<vmem>>, vector<2x8x16xf32>,
    %27 = vector.extract_strided_slice %8 {offsets = [0, 0, 16], sizes = [2, 8, 16], strides = [1, 1, 1]} : vector<2x8x64xf32> to vector<2x8x16xf32>
    %28 = vector.extract_strided_slice %9 {offsets = [0, 0, 16], sizes = [2, 8, 16], strides = [1, 1, 1]} : vector<2x8x64xf32> to vector<2x8x16xf32>
    %29 = vector.extract_strided_slice %10 {offsets = [0, 0, 16], sizes = [2, 8, 16], strides = [1, 1, 1]} : vector<2x8x64xf32> to vector<2x8x16xf32>
    "tpu.trace_start"() <{level = 10 : i32, message = "bqd,bkd->bqk"}> : () -> ()
    %cst_13 = arith.constant dense<0.000000e+00> : vector<2x8x8xf32>
    %30 = tpu.matmul %27, %28, %cst_13 {dimension_numbers = #tpu.dot_dimension_numbers<[2], [2], [1], [1], [0, 0, 0, 1, 1, 1], [0], [0]>} : vector<2x8x16xf32>, vector<2x8x16xf32>, vector<2x8x8xf32> -> vector<2x8x8xf32>
    "tpu.trace_stop"() : () -> ()
    %cst_14 = arith.constant dense<0xFF800000> : vector<2x8xf32>
    %31 = vector.multi_reduction <maximumf>, %30, %cst_14 [2] : vector<2x8x8xf32> to vector<2x8xf32>
    %32 = vector.shape_cast %31 : vector<2x8xf32> to vector<2x8x1xf32>
    %33 = vector.broadcast %32 : vector<2x8x1xf32> to vector<2x8x8xf32>
    %34 = arith.subf %30, %33 : vector<2x8x8xf32>
    %35 = math.exp %34 : vector<2x8x8xf32>
    %cst_15 = arith.constant dense<0.000000e+00> : vector<2x8xf32>
    %36 = vector.multi_reduction <add>, %35, %cst_15 [2] : vector<2x8x8xf32> to vector<2x8xf32>
    %37 = vector.shape_cast %36 : vector<2x8xf32> to vector<2x8x1xf32>
    %38 = tpu.reciprocal %37 {approx = true} : vector<2x8x1xf32> -> vector<2x8x1xf32>
    %39 = vector.broadcast %38 : vector<2x8x1xf32> to vector<2x8x8xf32>
    %40 = arith.mulf %35, %39 : vector<2x8x8xf32>
    "tpu.trace_start"() <{level = 10 : i32, message = "bqk,bkd->bqd"}> : () -> ()
    %cst_16 = arith.constant dense<0.000000e+00> : vector<2x8x16xf32>
    %41 = tpu.matmul %40, %29, %cst_16 {dimension_numbers = #tpu.dot_dimension_numbers<[2], [1], [1], [2], [0, 0, 0, 1, 1, 2], [0], [0]>} : vector<2x8x8xf32>, vector<2x8x16xf32>, vector<2x8x16xf32> -> vector<2x8x16xf32>
    "tpu.trace_stop"() : () -> ()
    %c0_17 = arith.constant 0 : index
    %c0_18 = arith.constant 0 : index
    %c16 = arith.constant 16 : index
    %42 = vector.load %arg7[%c0_17, %c0_18, %c16] : memref<2x8x64xf32, #tpu.memory_space<vmem>>, vector<2x8x16xf32>
    tpu.vector_store %arg7[%c0_17, %c0_18, %c16], %41 {strides = array<i32>} : memref<2x8x64xf32, #tpu.memory_space<vmem>>, vector<2x8x16xf32>,
    %43 = vector.extract_strided_slice %8 {offsets = [0, 0, 32], sizes = [2, 8, 16], strides = [1, 1, 1]} : vector<2x8x64xf32> to vector<2x8x16xf32>
    %44 = vector.extract_strided_slice %9 {offsets = [0, 0, 32], sizes = [2, 8, 16], strides = [1, 1, 1]} : vector<2x8x64xf32> to vector<2x8x16xf32>
    %45 = vector.extract_strided_slice %10 {offsets = [0, 0, 32], sizes = [2, 8, 16], strides = [1, 1, 1]} : vector<2x8x64xf32> to vector<2x8x16xf32>
    "tpu.trace_start"() <{level = 10 : i32, message = "bqd,bkd->bqk"}> : () -> ()
    %cst_19 = arith.constant dense<0.000000e+00> : vector<2x8x8xf32>
    %46 = tpu.matmul %43, %44, %cst_19 {dimension_numbers = #tpu.dot_dimension_numbers<[2], [2], [1], [1], [0, 0, 0, 1, 1, 1], [0], [0]>} : vector<2x8x16xf32>, vector<2x8x16xf32>, vector<2x8x8xf32> -> vector<2x8x8xf32>
    "tpu.trace_stop"() : () -> ()
    %cst_20 = arith.constant dense<0xFF800000> : vector<2x8xf32>
    %47 = vector.multi_reduction <maximumf>, %46, %cst_20 [2] : vector<2x8x8xf32> to vector<2x8xf32>
    %48 = vector.shape_cast %47 : vector<2x8xf32> to vector<2x8x1xf32>
    %49 = vector.broadcast %48 : vector<2x8x1xf32> to vector<2x8x8xf32>
    %50 = arith.subf %46, %49 : vector<2x8x8xf32>
    %51 = math.exp %50 : vector<2x8x8xf32>
    %cst_21 = arith.constant dense<0.000000e+00> : vector<2x8xf32>
    %52 = vector.multi_reduction <add>, %51, %cst_21 [2] : vector<2x8x8xf32> to vector<2x8xf32>
    %53 = vector.shape_cast %52 : vector<2x8xf32> to vector<2x8x1xf32>
    %54 = tpu.reciprocal %53 {approx = true} : vector<2x8x1xf32> -> vector<2x8x1xf32>
    %55 = vector.broadcast %54 : vector<2x8x1xf32> to vector<2x8x8xf32>
    %56 = arith.mulf %51, %55 : vector<2x8x8xf32>
    "tpu.trace_start"() <{level = 10 : i32, message = "bqk,bkd->bqd"}> : () -> ()
    %cst_22 = arith.constant dense<0.000000e+00> : vector<2x8x16xf32>
    %57 = tpu.matmul %56, %45, %cst_22 {dimension_numbers = #tpu.dot_dimension_numbers<[2], [1], [1], [2], [0, 0, 0, 1, 1, 2], [0], [0]>} : vector<2x8x8xf32>, vector<2x8x16xf32>, vector<2x8x16xf32> -> vector<2x8x16xf32>
    "tpu.trace_stop"() : () -> ()
    %c0_23 = arith.constant 0 : index
    %c0_24 = arith.constant 0 : index
    %c32 = arith.constant 32 : index
    %58 = vector.load %arg7[%c0_23, %c0_24, %c32] : memref<2x8x64xf32, #tpu.memory_space<vmem>>, vector<2x8x16xf32>
    tpu.vector_store %arg7[%c0_23, %c0_24, %c32], %57 {strides = array<i32>} : memref<2x8x64xf32, #tpu.memory_space<vmem>>, vector<2x8x16xf32>,
    %59 = vector.extract_strided_slice %8 {offsets = [0, 0, 48], sizes = [2, 8, 16], strides = [1, 1, 1]} : vector<2x8x64xf32> to vector<2x8x16xf32>
    %60 = vector.extract_strided_slice %9 {offsets = [0, 0, 48], sizes = [2, 8, 16], strides = [1, 1, 1]} : vector<2x8x64xf32> to vector<2x8x16xf32>
    %61 = vector.extract_strided_slice %10 {offsets = [0, 0, 48], sizes = [2, 8, 16], strides = [1, 1, 1]} : vector<2x8x64xf32> to vector<2x8x16xf32>
    "tpu.trace_start"() <{level = 10 : i32, message = "bqd,bkd->bqk"}> : () -> ()
    %cst_25 = arith.constant dense<0.000000e+00> : vector<2x8x8xf32>
    %62 = tpu.matmul %59, %60, %cst_25 {dimension_numbers = #tpu.dot_dimension_numbers<[2], [2], [1], [1], [0, 0, 0, 1, 1, 1], [0], [0]>} : vector<2x8x16xf32>, vector<2x8x16xf32>, vector<2x8x8xf32> -> vector<2x8x8xf32>
    "tpu.trace_stop"() : () -> ()
    %cst_26 = arith.constant dense<0xFF800000> : vector<2x8xf32>
    %63 = vector.multi_reduction <maximumf>, %62, %cst_26 [2] : vector<2x8x8xf32> to vector<2x8xf32>
    %64 = vector.shape_cast %63 : vector<2x8xf32> to vector<2x8x1xf32>
    %65 = vector.broadcast %64 : vector<2x8x1xf32> to vector<2x8x8xf32>
    %66 = arith.subf %62, %65 : vector<2x8x8xf32>
    %67 = math.exp %66 : vector<2x8x8xf32>
    %cst_27 = arith.constant dense<0.000000e+00> : vector<2x8xf32>
    %68 = vector.multi_reduction <add>, %67, %cst_27 [2] : vector<2x8x8xf32> to vector<2x8xf32>
    %69 = vector.shape_cast %68 : vector<2x8xf32> to vector<2x8x1xf32>
    %70 = tpu.reciprocal %69 {approx = true} : vector<2x8x1xf32> -> vector<2x8x1xf32>
    %71 = vector.broadcast %70 : vector<2x8x1xf32> to vector<2x8x8xf32>
    %72 = arith.mulf %67, %71 : vector<2x8x8xf32>
    "tpu.trace_start"() <{level = 10 : i32, message = "bqk,bkd->bqd"}> : () -> ()
    %cst_28 = arith.constant dense<0.000000e+00> : vector<2x8x16xf32>
    %73 = tpu.matmul %72, %61, %cst_28 {dimension_numbers = #tpu.dot_dimension_numbers<[2], [1], [1], [2], [0, 0, 0, 1, 1, 2], [0], [0]>} : vector<2x8x8xf32>, vector<2x8x16xf32>, vector<2x8x16xf32> -> vector<2x8x16xf32>
    "tpu.trace_stop"() : () -> ()
    %c0_29 = arith.constant 0 : index
    %c0_30 = arith.constant 0 : index
    %c48 = arith.constant 48 : index
    %74 = vector.load %arg7[%c0_29, %c0_30, %c48] : memref<2x8x64xf32, #tpu.memory_space<vmem>>, vector<2x8x16xf32>
    tpu.vector_store %arg7[%c0_29, %c0_30, %c48], %73 {strides = array<i32>} : memref<2x8x64xf32, #tpu.memory_space<vmem>>, vector<2x8x16xf32>,
    %c0_31 = arith.constant 0 : index
    %c0_32 = arith.constant 0 : index
    %c0_33 = arith.constant 0 : index
    %75 = vector.load %arg7[%c0_31, %c0_32, %c0_33] : memref<2x8x64xf32, #tpu.memory_space<vmem>>, vector<2x8x64xf32>
    %76 = vector.shape_cast %75 : vector<2x8x64xf32> to vector<16x64xf32>
    %c0_34 = arith.constant 0 : index
    %c0_35 = arith.constant 0 : index
    %77 = vector.load %arg4[%c0_34, %c0_35] : memref<64x64xf32, #tpu.memory_space<vmem>>, vector<64x64xf32>
    %cst_36 = arith.constant dense<0.000000e+00> : vector<16x64xf32>
    %78 = tpu.matmul %76, %77, %cst_36 {dimension_numbers = #tpu.dot_dimension_numbers<[1], [0], [0], [1], [0, 0, 1, 1], [], []>} : vector<16x64xf32>, vector<64x64xf32>, vector<16x64xf32> -> vector<16x64xf32>
    %c0_37 = arith.constant 0 : index
    %c0_38 = arith.constant 0 : index
    %79 = vector.load %arg5[%c0_37, %c0_38] : memref<1x64xf32, #tpu.memory_space<vmem>>, vector<1x64xf32>
    %80 = vector.broadcast %79 : vector<1x64xf32> to vector<16x64xf32>
    %81 = arith.addf %78, %80 : vector<16x64xf32>
    %82 = vector.shape_cast %81 : vector<16x64xf32> to vector<2x8x64xf32>
    %c0_39 = arith.constant 0 : index
    %c0_40 = arith.constant 0 : index
    %c0_41 = arith.constant 0 : index
    %83 = vector.load %arg6[%c0_39, %c0_40, %c0_41] : memref<2x8x64xf32, #tpu.memory_space<vmem>>, vector<2x8x64xf32>
    tpu.vector_store %arg6[%c0_39, %c0_40, %c0_41], %82 {strides = array<i32>} : memref<2x8x64xf32, #tpu.memory_space<vmem>>, vector<2x8x64xf32>,
    return
  }
  func.func @transform_0(%arg0: i32) -> (i32, i32, i32) {
    %c0_i32 = arith.constant 0 : i32
    %c0_i32_0 = arith.constant 0 : i32
    %c0_i32_1 = arith.constant 0 : i32
    return %arg0, %c0_i32, %c0_i32_0 : i32, i32, i32
  }
  func.func @transform_1(%arg0: i32) -> (i32, i32) {
    %c0_i32 = arith.constant 0 : i32
    %c0_i32_0 = arith.constant 0 : i32
    %c0_i32_1 = arith.constant 0 : i32
    return %c0_i32, %c0_i32_0 : i32, i32
  }
  func.func @transform_2(%arg0: i32) -> (i32, i32) {
    %c0_i32 = arith.constant 0 : i32
    %c0_i32_0 = arith.constant 0 : i32
    %c0_i32_1 = arith.constant 0 : i32
    return %c0_i32, %c0_i32_0 : i32, i32
  }
  func.func @transform_3(%arg0: i32) -> (i32, i32) {
    %c0_i32 = arith.constant 0 : i32
    %c0_i32_0 = arith.constant 0 : i32
    %c0_i32_1 = arith.constant 0 : i32
    return %c0_i32, %c0_i32_0 : i32, i32
  }
  func.func @transform_4(%arg0: i32) -> (i32, i32) {
    %c0_i32 = arith.constant 0 : i32
    %c0_i32_0 = arith.constant 0 : i32
    %c0_i32_1 = arith.constant 0 : i32
    return %c0_i32, %c0_i32_0 : i32, i32
  }
  func.func @transform_5(%arg0: i32) -> (i32, i32, i32) {
    %c0_i32 = arith.constant 0 : i32
    %c0_i32_0 = arith.constant 0 : i32
    %c0_i32_1 = arith.constant 0 : i32
    return %arg0, %c0_i32, %c0_i32_0 : i32, i32, i32
  }
}

</mosaic_0001>

<llo_original>
// kernel: tpu_custom_call.1
$region0: #{tpu_custom_call.1}
  #allocation0 [shape = 'u32[]', space=smem, size = 0x4, offset = 0x4, fixed_abs, tag = 'smem constant byte address 0x4 - core index']
  #allocation1 [shape = 'u32[144,128]{1,0:T(1,128)}', space=vmem, size = 0x12000, scoped, tag = 'internal scratch']
  #allocation2 [shape = 'f32[2,8,64]{2,1,0:T(8,128)}', space=vmem, size = 0x2000, scoped, tag = 'scratch operand']
  %s0 = inlined_call_operand.hbm [shape: f32[2,8,192], index: 0, kind: input, shape index: {}]
  %s1 = inlined_call_operand.hbm [shape: f32[192,192], index: 1, kind: input, shape index: {}]
  %s2 = inlined_call_operand.vmem [shape: f32[1,192], index: 2, kind: input, shape index: {}]
  %s3 = inlined_call_operand.hbm [shape: f32[64,64], index: 3, kind: input, shape index: {}]
  %s4 = inlined_call_operand.vmem [shape: f32[1,64], index: 4, kind: input, shape index: {}]
  %s5 = inlined_call_operand.hbm [shape: f32[2,8,64], index: 5, kind: output, shape index: {}]
  %s6 = sld [smem:[#allocation0]]
  $region42: #{tpu_custom_call.1} parent=0
    _
  %s8 = ssub.s32 1, %s6
  %s9 = scalar_select 0, %s8, %s6
  $region1: #{tpu_custom_call.1} parent=0
    #allocation3 [shape = 'u8[16384]{0}', space=vmem, size = 0x4000, scoped, tag = 'input window, operand 0, single buffered']
    #allocation4 [shape = 's32[1]{0}', space=sflag, size = 0x4, scoped, tag = 'scoped memory for tpu_custom_call.1']
    #allocation5 [shape = 's32[1]{0}', space=sflag, size = 0x4, scoped, tag = 'scoped memory for tpu_custom_call.1']
    #allocation6 [shape = 'u8[196608]{0}', space=vmem, size = 0x30000, scoped, tag = 'input window, operand 1, single buffered']
    #allocation7 [shape = 's32[1]{0}', space=sflag, size = 0x4, scoped, tag = 'scoped memory for tpu_custom_call.1']
    #allocation8 [shape = 'u8[32768]{0}', space=vmem, size = 0x8000, scoped, tag = 'input window, operand 3, single buffered']
    #allocation9 [shape = 'u8[8192]{0}', space=vmem, size = 0x2000, scoped, tag = 'output window, operand 0, single buffered']
    %10 = vsyncpa [#allocation4], 0
    %11 = vsyncpa [#allocation7], 0
    %12 = vsyncpa [#allocation5], 0
    // Predicated region
    $region2: #{tpu_custom_call.1} parent=1 // pred_check
      _
    $region3: #{tpu_custom_call.1} parent=1 // pred_check_branch
      %14 = sbr.rel (0) target = $region5
    $region4: #{tpu_custom_call.1} parent=1 // pred_region
      %s16 = ssub.s32 512, 512
      %17 = vsyncadd [#allocation4], %s16
      %s18 = sshll.u32 [#allocation3], 4
      %s19 = int_to_ptr.vmem [resolvable:$true] %s18
      %24 = dma.hbm_to_vmem [thread:$0]  %s0, 512, %s19, [#allocation4], 256, 256, 16
    $region5: #{tpu_custom_call.1} parent=1 // pred_fallthru
      _
    // Predicated region
    $region6: #{tpu_custom_call.1} parent=1 // pred_check
      _
    $region7: #{tpu_custom_call.1} parent=1 // pred_check_branch
      %26 = sbr.rel (0) target = $region9
    $region8: #{tpu_custom_call.1} parent=1 // pred_region
      %s28 = ssub.s32 6144, 6144
      %29 = vsyncadd [#allocation7], %s28
      %s30 = sshll.u32 [#allocation6], 4
      %s31 = int_to_ptr.vmem [resolvable:$true] %s30
      %36 = dma.hbm_to_vmem [thread:$0]  %s1, 6144, %s31, [#allocation7], 256, 256, 16
    $region9: #{tpu_custom_call.1} parent=1 // pred_fallthru
      _
    // Predicated region
    $region10: #{tpu_custom_call.1} parent=1 // pred_check
      _
    $region11: #{tpu_custom_call.1} parent=1 // pred_check_branch
      %38 = sbr.rel (0) target = $region13
    $region12: #{tpu_custom_call.1} parent=1 // pred_region
      _
    $region13: #{tpu_custom_call.1} parent=1 // pred_fallthru
      _
    // Predicated region
    $region14: #{tpu_custom_call.1} parent=1 // pred_check
      _
    $region15: #{tpu_custom_call.1} parent=1 // pred_check_branch
      %40 = sbr.rel (0) target = $region17
    $region16: #{tpu_custom_call.1} parent=1 // pred_region
      %s42 = ssub.s32 1024, 1024
      %43 = vsyncadd [#allocation7], %s42
      %s44 = sshll.u32 [#allocation8], 4
      %s45 = int_to_ptr.vmem [resolvable:$true] %s44
      %50 = dma.hbm_to_vmem [thread:$0]  %s3, 1024, %s45, [#allocation7], 128, 128, 8
    $region17: #{tpu_custom_call.1} parent=1 // pred_fallthru
      _
    // Predicated region
    $region18: #{tpu_custom_call.1} parent=1 // pred_check
      _
    $region19: #{tpu_custom_call.1} parent=1 // pred_check_branch
      %52 = sbr.rel (0) target = $region21
    $region20: #{tpu_custom_call.1} parent=1 // pred_region
      _
    $region21: #{tpu_custom_call.1} parent=1 // pred_fallthru
      _
    // Predicated region
    $region22: #{tpu_custom_call.1} parent=1 // pred_check
      _
    $region23: #{tpu_custom_call.1} parent=1 // pred_check_branch
      %54 = sbr.rel (0) target = $region25
    $region24: #{tpu_custom_call.1} parent=1 // pred_region
      %55 = dma.done [#allocation4], 512
    $region25: #{tpu_custom_call.1} parent=1 // pred_fallthru
      _
    // Predicated region
    $region26: #{tpu_custom_call.1} parent=1 // pred_check
      _
    $region27: #{tpu_custom_call.1} parent=1 // pred_check_branch
      %57 = sbr.rel (0) target = $region29
    $region28: #{tpu_custom_call.1} parent=1 // pred_region
      %58 = dma.done [#allocation7], 6144
    $region29: #{tpu_custom_call.1} parent=1 // pred_fallthru
      _
    // Predicated region
    $region30: #{tpu_custom_call.1} parent=1 // pred_check
      _
    $region31: #{tpu_custom_call.1} parent=1 // pred_check_branch
      %60 = sbr.rel (0) target = $region33
    $region32: #{tpu_custom_call.1} parent=1 // pred_region
      %61 = dma.done [#allocation7], 1024
    $region33: #{tpu_custom_call.1} parent=1 // pred_fallthru
      _
    %v62 = vld [vmem:[#allocation3] sm:$0xff]
    %v63 = vld [vmem:[#allocation3 + $0x8] sm:$0xff]
    %v64 = vld [vmem:[#allocation3 + $0x10] sm:$0xff]
    %v65 = vld [vmem:[#allocation3 + $0x18] sm:$0xff]
    %v66 = vld [vmem:[#allocation6] sm:$0xff]
    %v67 = vld [vmem:[#allocation6 + $0x8] sm:$0xff]
    %v68 = vld [vmem:[#allocation6 + $0x10] sm:$0xff]
    %v69 = vld [vmem:[#allocation6 + $0x18] sm:$0xff]
    %v70 = vld [vmem:[#allocation6 + $0x20] sm:$0xff]
    %v71 = vld [vmem:[#allocation6 + $0x28] sm:$0xff]
    %v72 = vld [vmem:[#allocation6 + $0x30] sm:$0xff]
    %v73 = vld [vmem:[#allocation6 + $0x38] sm:$0xff]
    %v74 = vld [vmem:[#allocation6 + $0x40] sm:$0xff]
    %v75 = vld [vmem:[#allocation6 + $0x48] sm:$0xff]
    %v76 = vld [vmem:[#allocation6 + $0x50] sm:$0xff]
    %v77 = vld [vmem:[#allocation6 + $0x58] sm:$0xff]
    %v78 = vld [vmem:[#allocation6 + $0x60] sm:$0xff]
    %v79 = vld [vmem:[#allocation6 + $0x68] sm:$0xff]
    %v80 = vld [vmem:[#allocation6 + $0x70] sm:$0xff]
    %v81 = vld [vmem:[#allocation6 + $0x78] sm:$0xff]
    %v82 = vld [vmem:[#allocation6 + $0x80] sm:$0xff]
    %v83 = vld [vmem:[#allocation6 + $0x88] sm:$0xff]
    %v84 = vld [vmem:[#allocation6 + $0x90] sm:$0xff]
    %v85 = vld [vmem:[#allocation6 + $0x98] sm:$0xff]
    %v86 = vld [vmem:[#allocation6 + $0xa0] sm:$0xff]
    %v87 = vld [vmem:[#allocation6 + $0xa8] sm:$0xff]
    %v88 = vld [vmem:[#allocation6 + $0xb0] sm:$0xff]
    %v89 = vld [vmem:[#allocation6 + $0xb8] sm:$0xff]
    %v90 = vld [vmem:[#allocation6 + $0xc0] sm:$0xff]
    %v91 = vld [vmem:[#allocation6 + $0xc8] sm:$0xff]
    %v92 = vld [vmem:[#allocation6 + $0xd0] sm:$0xff]
    %v93 = vld [vmem:[#allocation6 + $0xd8] sm:$0xff]
    %v94 = vld [vmem:[#allocation6 + $0xe0] sm:$0xff]
    %v95 = vld [vmem:[#allocation6 + $0xe8] sm:$0xff]
    %v96 = vld [vmem:[#allocation6 + $0xf0] sm:$0xff]
    %v97 = vld [vmem:[#allocation6 + $0xf8] sm:$0xff]
    %v98 = vld [vmem:[#allocation6 + $0x100] sm:$0xff]
    %v99 = vld [vmem:[#allocation6 + $0x108] sm:$0xff]
    %v100 = vld [vmem:[#allocation6 + $0x110] sm:$0xff]
    %v101 = vld [vmem:[#allocation6 + $0x118] sm:$0xff]
    %v102 = vld [vmem:[#allocation6 + $0x120] sm:$0xff]
    %v103 = vld [vmem:[#allocation6 + $0x128] sm:$0xff]
    %v104 = vld [vmem:[#allocation6 + $0x130] sm:$0xff]
    %v105 = vld [vmem:[#allocation6 + $0x138] sm:$0xff]
    %v106 = vld [vmem:[#allocation6 + $0x140] sm:$0xff]
    %v107 = vld [vmem:[#allocation6 + $0x148] sm:$0xff]
    %v108 = vld [vmem:[#allocation6 + $0x150] sm:$0xff]
    %v109 = vld [vmem:[#allocation6 + $0x158] sm:$0xff]
    %v110 = vld [vmem:[#allocation6 + $0x160] sm:$0xff]
    %v111 = vld [vmem:[#allocation6 + $0x168] sm:$0xff]
    %v112 = vld [vmem:[#allocation6 + $0x170] sm:$0xff]
    %v113 = vld [vmem:[#allocation6 + $0x178] sm:$0xff]
    %v114 = vld [vmem:[%s2] sm:$0x3]
    %v116 = vlaneseq
    %v117 = vshrl.u32 %v116, 7
    %v118 = vsub.s32 0, %v117
    %v119 = vrot.slane %v114, %v118
    %v120 = vlaneseq
    %v121 = vshrl.u32 %v120, 7
    %v122 = vsub.s32 1, %v121
    %v123 = vrot.slane %v114, %v122
    %vm126 = vcmask 523264
    %v128 = vsel %vm126, %v63, 0
    %v131 = vsel %vm126, %v65, 0
    %133 = vmatprep.subr.mxu0 %v97
    %134 = vmatpush1.msra.mxu0 %v96
    %135 = vmatprep.subr.mxu0 %v95
    %136 = vmatpush1.msra.mxu0 %v94
    %137 = vmatprep.subr.mxu0 %v93
    %138 = vmatpush1.msra.mxu0 %v92
    %139 = vmatprep.subr.mxu0 %v91
    %140 = vmatpush1.msra.mxu0 %v90
    %141 = vmatprep.subr.mxu0 %v89
    %142 = vmatpush1.msra.mxu0 %v88
    %143 = vmatprep.subr.mxu0 %v87
    %144 = vmatpush1.msra.mxu0 %v86
    %145 = vmatprep.subr.mxu0 %v85
    %146 = vmatpush1.msra.mxu0 %v84
    %147 = vmatprep.subr.mxu0 %v83
    %148 = vmatpush1.msra.mxu0 %v82
    %149 = vmatprep.subr.mxu0 %v81
    %150 = vmatpush1.msra.mxu0 %v80
    %151 = vmatprep.subr.mxu0 %v79
    %152 = vmatpush1.msra.mxu0 %v78
    %153 = vmatprep.subr.mxu0 %v77
    %154 = vmatpush1.msra.mxu0 %v76
    %155 = vmatprep.subr.mxu0 %v75
    %156 = vmatpush1.msra.mxu0 %v74
    %157 = vmatprep.subr.mxu0 %v73
    %158 = vmatpush1.msra.mxu0 %v72
    %159 = vmatprep.subr.mxu0 %v71
    %160 = vmatpush1.msra.mxu0 %v70
    %161 = vmatprep.subr.mxu0 %v69
    %162 = vmatpush1.msra.mxu0 %v68
    %163 = vmatprep.subr.mxu0 %v67
    %164 = vmatpush1.msra.mxu0 %v66
    %165 = vmatprep.subr.mxu0 0.0
    %166 = vmatpush2.msra.mxu0 0.0
    %167 = vmatprep.subr.mxu0 0.0
    %168 = vmatpush2.msra.mxu0 0.0
    %169 = vmatprep.subr.mxu0 0.0
    %170 = vmatpush2.msra.mxu0 0.0
    %171 = vmatprep.subr.mxu0 0.0
    %172 = vmatpush2.msra.mxu0 0.0
    %173 = vmatprep.subr.mxu0 0.0
    %174 = vmatpush2.msra.mxu0 0.0
    %175 = vmatprep.subr.mxu0 0.0
    %176 = vmatpush2.msra.mxu0 0.0
    %177 = vmatprep.subr.mxu0 0.0
    %178 = vmatpush2.msra.mxu0 0.0
    %179 = vmatprep.subr.mxu0 0.0
    %180 = vmatpush2.msra.mxu0 0.0
    %181 = vmatprep.subr.mxu0 %v113
    %182 = vmatpush2.msra.mxu0 %v112
    %183 = vmatprep.subr.mxu0 %v111
    %184 = vmatpush2.msra.mxu0 %v110
    %185 = vmatprep.subr.mxu0 %v109
    %186 = vmatpush2.msra.mxu0 %v108
    %187 = vmatprep.subr.mxu0 %v107
    %188 = vmatpush2.msra.mxu0 %v106
    %189 = vmatprep.subr.mxu0 %v105
    %190 = vmatpush2.msra.mxu0 %v104
    %191 = vmatprep.subr.mxu0 %v103
    %192 = vmatpush2.msra.mxu0 %v102
    %193 = vmatprep.subr.mxu0 %v101
    %194 = vmatpush2.msra.mxu0 %v100
    %195 = vmatprep.subr.mxu0 %v99
    %196 = vmatpush2.msra.mxu0 %v98
    %197 = vmatprep.mubr.f32.mxu0 %v128
    %198 = vmatmul.mubr.f32.gmra.mxu0 %v62
    %v199 = vpop.f32.mrf.mxu0
    %v200 = vadd.f32 %v119, %v199
    %v201 = vpop.f32.mrf.mxu0
    %v202 = vadd.f32 %v123, %v201
    %203 = vmatprep.mubr.f32.mxu0 %v131
    %204 = vmatmul.mubr.f32.gmra.mxu0 %v64
    %v205 = vpop.f32.mrf.mxu0
    %v206 = vadd.f32 %v119, %v205
    %v207 = vpop.f32.mrf.mxu0
    %v208 = vadd.f32 %v123, %v207
    %209 = vdwg.mxu0
    %211 = vrot.lane.b32.xlu0 %v200, 64
    %v212 = vpop.permute.xlu0 %211
    %vm213 = vcmask 130048
    %v214 = vsel %vm213, %v200, 0
    %v216 = vsel %vm213, %v212, 0
    %218 = vmatprep.subr.mxu0 0.0
    %219 = vmatpush1.xpose.msra.mxu0 0.0
    %220 = vmatprep.subr.mxu0 0.0
    %221 = vmatpush1.xpose.msra.mxu0 0.0
    %222 = vmatprep.subr.mxu0 0.0
    %223 = vmatpush1.xpose.msra.mxu0 0.0
    %224 = vmatprep.subr.mxu0 0.0
    %225 = vmatpush1.xpose.msra.mxu0 0.0
    %226 = vmatprep.subr.mxu0 0.0
    %227 = vmatpush1.xpose.msra.mxu0 0.0
    %228 = vmatprep.subr.mxu0 0.0
    %229 = vmatpush1.xpose.msra.mxu0 0.0
    %230 = vmatprep.subr.mxu0 0.0
    %231 = vmatpush1.xpose.msra.mxu0 0.0
    %232 = vmatprep.subr.mxu0 0.0
    %233 = vmatpush1.xpose.msra.mxu0 0.0
    %234 = vmatprep.subr.mxu0 0.0
    %235 = vmatpush1.xpose.msra.mxu0 0.0
    %236 = vmatprep.subr.mxu0 0.0
    %237 = vmatpush1.xpose.msra.mxu0 0.0
    %238 = vmatprep.subr.mxu0 0.0
    %239 = vmatpush1.xpose.msra.mxu0 0.0
    %240 = vmatprep.subr.mxu0 0.0
    %241 = vmatpush1.xpose.msra.mxu0 0.0
    %242 = vmatprep.subr.mxu0 0.0
    %243 = vmatpush1.xpose.msra.mxu0 0.0
    %244 = vmatprep.subr.mxu0 0.0
    %245 = vmatpush1.xpose.msra.mxu0 0.0
    %246 = vmatprep.subr.mxu0 0.0
    %247 = vmatpush1.xpose.msra.mxu0 0.0
    %248 = vmatprep.subr.mxu0 0.0
    %249 = vmatpush1.xpose.msra.mxu0 %v216
    %250 = vmatprep.subr.mxu0 0.0
    %251 = vmatpush2.xpose.msra.mxu0 0.0
    %252 = vmatprep.subr.mxu0 0.0
    %253 = vmatpush2.xpose.msra.mxu0 0.0
    %254 = vmatprep.subr.mxu0 0.0
    %255 = vmatpush2.xpose.msra.mxu0 0.0
    %256 = vmatprep.subr.mxu0 0.0
    %257 = vmatpush2.xpose.msra.mxu0 0.0
    %258 = vmatprep.subr.mxu0 0.0
    %259 = vmatpush2.xpose.msra.mxu0 0.0
    %260 = vmatprep.subr.mxu0 0.0
    %261 = vmatpush2.xpose.msra.mxu0 0.0
    %262 = vmatprep.subr.mxu0 0.0
    %263 = vmatpush2.xpose.msra.mxu0 0.0
    %264 = vmatprep.subr.mxu0 0.0
    %265 = vmatpush2.xpose.msra.mxu0 0.0
    %266 = vmatprep.subr.mxu0 0.0
    %267 = vmatpush2.xpose.msra.mxu0 0.0
    %268 = vmatprep.subr.mxu0 0.0
    %269 = vmatpush2.xpose.msra.mxu0 0.0
    %270 = vmatprep.subr.mxu0 0.0
    %271 = vmatpush2.xpose.msra.mxu0 0.0
    %272 = vmatprep.subr.mxu0 0.0
    %273 = vmatpush2.xpose.msra.mxu0 0.0
    %274 = vmatprep.subr.mxu0 0.0
    %275 = vmatpush2.xpose.msra.mxu0 0.0
    %276 = vmatprep.subr.mxu0 0.0
    %277 = vmatpush2.xpose.msra.mxu0 0.0
    %278 = vmatprep.subr.mxu0 0.0
    %279 = vmatpush2.xpose.msra.mxu0 0.0
    %280 = vmatprep.subr.mxu0 0.0
    %281 = vmatpush2.xpose.msra.mxu0 0.0
    %282 = vmatprep.mubr.f32.mxu0 0.0
    %283 = vmatmul.mubr.f32.gmra.mxu0 %v214
    %v284 = vpop.f32.mrf.mxu0
    %v285 = vadd.f32 0.0, %v284
    %v286 = vpop.f32.mrf.mxu0
    %287 = vdwg.mxu0
    %289 = vrot.lane.b32.xlu0 %v206, 64
    %v290 = vpop.permute.xlu0 %289
    %v291 = vsel %vm213, %v206, 0
    %v293 = vsel %vm213, %v290, 0
    %295 = vmatprep.subr.mxu0 0.0
    %296 = vmatpush1.xpose.msra.mxu0 0.0
    %297 = vmatprep.subr.mxu0 0.0
    %298 = vmatpush1.xpose.msra.mxu0 0.0
    %299 = vmatprep.subr.mxu0 0.0
    %300 = vmatpush1.xpose.msra.mxu0 0.0
    %301 = vmatprep.subr.mxu0 0.0
    %302 = vmatpush1.xpose.msra.mxu0 0.0
    %303 = vmatprep.subr.mxu0 0.0
    %304 = vmatpush1.xpose.msra.mxu0 0.0
    %305 = vmatprep.subr.mxu0 0.0
    %306 = vmatpush1.xpose.msra.mxu0 0.0
    %307 = vmatprep.subr.mxu0 0.0
    %308 = vmatpush1.xpose.msra.mxu0 0.0
    %309 = vmatprep.subr.mxu0 0.0
    %310 = vmatpush1.xpose.msra.mxu0 0.0
    %311 = vmatprep.subr.mxu0 0.0
    %312 = vmatpush1.xpose.msra.mxu0 0.0
    %313 = vmatprep.subr.mxu0 0.0
    %314 = vmatpush1.xpose.msra.mxu0 0.0
    %315 = vmatprep.subr.mxu0 0.0
    %316 = vmatpush1.xpose.msra.mxu0 0.0
    %317 = vmatprep.subr.mxu0 0.0
    %318 = vmatpush1.xpose.msra.mxu0 0.0
    %319 = vmatprep.subr.mxu0 0.0
    %320 = vmatpush1.xpose.msra.mxu0 0.0
    %321 = vmatprep.subr.mxu0 0.0
    %322 = vmatpush1.xpose.msra.mxu0 0.0
    %323 = vmatprep.subr.mxu0 0.0
    %324 = vmatpush1.xpose.msra.mxu0 0.0
    %325 = vmatprep.subr.mxu0 0.0
    %326 = vmatpush1.xpose.msra.mxu0 %v293
    %327 = vmatprep.subr.mxu0 0.0
    %328 = vmatpush2.xpose.msra.mxu0 0.0
    %329 = vmatprep.subr.mxu0 0.0
    %330 = vmatpush2.xpose.msra.mxu0 0.0
    %331 = vmatprep.subr.mxu0 0.0
    %332 = vmatpush2.xpose.msra.mxu0 0.0
    %333 = vmatprep.subr.mxu0 0.0
    %334 = vmatpush2.xpose.msra.mxu0 0.0
    %335 = vmatprep.subr.mxu0 0.0
    %336 = vmatpush2.xpose.msra.mxu0 0.0
    %337 = vmatprep.subr.mxu0 0.0
    %338 = vmatpush2.xpose.msra.mxu0 0.0
    %339 = vmatprep.subr.mxu0 0.0
    %340 = vmatpush2.xpose.msra.mxu0 0.0
    %341 = vmatprep.subr.mxu0 0.0
    %342 = vmatpush2.xpose.msra.mxu0 0.0
    %343 = vmatprep.subr.mxu0 0.0
    %344 = vmatpush2.xpose.msra.mxu0 0.0
    %345 = vmatprep.subr.mxu0 0.0
    %346 = vmatpush2.xpose.msra.mxu0 0.0
    %347 = vmatprep.subr.mxu0 0.0
    %348 = vmatpush2.xpose.msra.mxu0 0.0
    %349 = vmatprep.subr.mxu0 0.0
    %350 = vmatpush2.xpose.msra.mxu0 0.0
    %351 = vmatprep.subr.mxu0 0.0
    %352 = vmatpush2.xpose.msra.mxu0 0.0
    %353 = vmatprep.subr.mxu0 0.0
    %354 = vmatpush2.xpose.msra.mxu0 0.0
    %355 = vmatprep.subr.mxu0 0.0
    %356 = vmatpush2.xpose.msra.mxu0 0.0
    %357 = vmatprep.subr.mxu0 0.0
    %358 = vmatpush2.xpose.msra.mxu0 0.0
    %359 = vmatprep.mubr.f32.mxu0 0.0
    %360 = vmatmul.mubr.f32.gmra.mxu0 %v291
    %v361 = vpop.f32.mrf.mxu0
    %v362 = vadd.f32 0.0, %v361
    %v363 = vpop.f32.mrf.mxu0
    %364 = vdwg.mxu0
    %vm365 = vcmask 64512
    %v366 = vsel %vm365, %v285, -inf
    %367 = vmax.xlane.f32.xlu0 %v366
    %v368 = vpop.xlane.xlu0 %367
    %v369 = vsel %vm365, %v362, -inf
    %370 = vmax.xlane.f32.xlu0 %v369
    %v371 = vpop.xlane.xlu0 %370
    %v372 = vsub.f32 %v285, %v368
    %v373 = vsub.f32 %v362, %v371
    %v374 = vmul.f32 %v372, 1.442695
    %v375 = vpow.pop %v374
    %v376 = vmul.f32 %v373, 1.442695
    %v377 = vpow.pop %v376
    %v378 = vsel %vm365, %v375, 0.0
    %379 = vadd.xlane.f32.xlu0 %v378
    %v380 = vpop.xlane.xlu0 %379
    %v381 = vsel %vm365, %v377, 0.0
    %382 = vadd.xlane.f32.xlu0 %v381
    %v383 = vpop.xlane.xlu0 %382
    %v384 = vrcp.pop %v380
    %v385 = vrcp.pop %v383
    %v386 = vmul.f32 %v375, %v384
    %v387 = vmul.f32 %v377, %v385
    %v389 = vsel %vm365, %v386, 0
    %391 = vmatprep.subr.mxu0 0.0
    %392 = vmatpush1.msra.mxu0 0.0
    %393 = vmatprep.subr.mxu0 0.0
    %394 = vmatpush1.msra.mxu0 0.0
    %395 = vmatprep.subr.mxu0 0.0
    %396 = vmatpush1.msra.mxu0 0.0
    %397 = vmatprep.subr.mxu0 0.0
    %398 = vmatpush1.msra.mxu0 0.0
    %399 = vmatprep.subr.mxu0 0.0
    %400 = vmatpush1.msra.mxu0 0.0
    %401 = vmatprep.subr.mxu0 0.0
    %402 = vmatpush1.msra.mxu0 0.0
    %403 = vmatprep.subr.mxu0 0.0
    %404 = vmatpush1.msra.mxu0 0.0
    %405 = vmatprep.subr.mxu0 0.0
    %406 = vmatpush1.msra.mxu0 0.0
    %407 = vmatprep.subr.mxu0 0.0
    %408 = vmatpush1.msra.mxu0 0.0
    %409 = vmatprep.subr.mxu0 0.0
    %410 = vmatpush1.msra.mxu0 0.0
    %411 = vmatprep.subr.mxu0 0.0
    %412 = vmatpush1.msra.mxu0 0.0
    %413 = vmatprep.subr.mxu0 0.0
    %414 = vmatpush1.msra.mxu0 0.0
    %415 = vmatprep.subr.mxu0 0.0
    %416 = vmatpush1.msra.mxu0 0.0
    %417 = vmatprep.subr.mxu0 0.0
    %418 = vmatpush1.msra.mxu0 0.0
    %419 = vmatprep.subr.mxu0 0.0
    %420 = vmatpush1.msra.mxu0 0.0
    %421 = vmatprep.subr.mxu0 0.0
    %422 = vmatpush1.msra.mxu0 %v202
    %423 = vmatprep.subr.mxu0 0.0
    %424 = vmatpush2.msra.mxu0 0.0
    %425 = vmatprep.subr.mxu0 0.0
    %426 = vmatpush2.msra.mxu0 0.0
    %427 = vmatprep.subr.mxu0 0.0
    %428 = vmatpush2.msra.mxu0 0.0
    %429 = vmatprep.subr.mxu0 0.0
    %430 = vmatpush2.msra.mxu0 0.0
    %431 = vmatprep.subr.mxu0 0.0
    %432 = vmatpush2.msra.mxu0 0.0
    %433 = vmatprep.subr.mxu0 0.0
    %434 = vmatpush2.msra.mxu0 0.0
    %435 = vmatprep.subr.mxu0 0.0
    %436 = vmatpush2.msra.mxu0 0.0
    %437 = vmatprep.subr.mxu0 0.0
    %438 = vmatpush2.msra.mxu0 0.0
    %439 = vmatprep.subr.mxu0 0.0
    %440 = vmatpush2.msra.mxu0 0.0
    %441 = vmatprep.subr.mxu0 0.0
    %442 = vmatpush2.msra.mxu0 0.0
    %443 = vmatprep.subr.mxu0 0.0
    %444 = vmatpush2.msra.mxu0 0.0
    %445 = vmatprep.subr.mxu0 0.0
    %446 = vmatpush2.msra.mxu0 0.0
    %447 = vmatprep.subr.mxu0 0.0
    %448 = vmatpush2.msra.mxu0 0.0
    %449 = vmatprep.subr.mxu0 0.0
    %450 = vmatpush2.msra.mxu0 0.0
    %451 = vmatprep.subr.mxu0 0.0
    %452 = vmatpush2.msra.mxu0 0.0
    %453 = vmatprep.subr.mxu0 0.0
    %454 = vmatpush2.msra.mxu0 0.0
    %455 = vmatprep.mubr.f32.mxu0 0.0
    %456 = vmatmul.mubr.f32.gmra.mxu0 %v389
    %v457 = vpop.f32.mrf.mxu0
    %v458 = vadd.f32 0.0, %v457
    %v459 = vpop.f32.mrf.mxu0
    %460 = vdwg.mxu0
    %v462 = vsel %vm365, %v387, 0
    %464 = vmatprep.subr.mxu0 0.0
    %465 = vmatpush1.msra.mxu0 0.0
    %466 = vmatprep.subr.mxu0 0.0
    %467 = vmatpush1.msra.mxu0 0.0
    %468 = vmatprep.subr.mxu0 0.0
    %469 = vmatpush1.msra.mxu0 0.0
    %470 = vmatprep.subr.mxu0 0.0
    %471 = vmatpush1.msra.mxu0 0.0
    %472 = vmatprep.subr.mxu0 0.0
    %473 = vmatpush1.msra.mxu0 0.0
    %474 = vmatprep.subr.mxu0 0.0
    %475 = vmatpush1.msra.mxu0 0.0
    %476 = vmatprep.subr.mxu0 0.0
    %477 = vmatpush1.msra.mxu0 0.0
    %478 = vmatprep.subr.mxu0 0.0
    %479 = vmatpush1.msra.mxu0 0.0
    %480 = vmatprep.subr.mxu0 0.0
    %481 = vmatpush1.msra.mxu0 0.0
    %482 = vmatprep.subr.mxu0 0.0
    %483 = vmatpush1.msra.mxu0 0.0
    %484 = vmatprep.subr.mxu0 0.0
    %485 = vmatpush1.msra.mxu0 0.0
    %486 = vmatprep.subr.mxu0 0.0
    %487 = vmatpush1.msra.mxu0 0.0
    %488 = vmatprep.subr.mxu0 0.0
    %489 = vmatpush1.msra.mxu0 0.0
    %490 = vmatprep.subr.mxu0 0.0
    %491 = vmatpush1.msra.mxu0 0.0
    %492 = vmatprep.subr.mxu0 0.0
    %493 = vmatpush1.msra.mxu0 0.0
    %494 = vmatprep.subr.mxu0 0.0
    %495 = vmatpush1.msra.mxu0 %v208
    %496 = vmatprep.subr.mxu0 0.0
    %497 = vmatpush2.msra.mxu0 0.0
    %498 = vmatprep.subr.mxu0 0.0
    %499 = vmatpush2.msra.mxu0 0.0
    %500 = vmatprep.subr.mxu0 0.0
    %501 = vmatpush2.msra.mxu0 0.0
    %502 = vmatprep.subr.mxu0 0.0
    %503 = vmatpush2.msra.mxu0 0.0
    %504 = vmatprep.subr.mxu0 0.0
    %505 = vmatpush2.msra.mxu0 0.0
    %506 = vmatprep.subr.mxu0 0.0
    %507 = vmatpush2.msra.mxu0 0.0
    %508 = vmatprep.subr.mxu0 0.0
    %509 = vmatpush2.msra.mxu0 0.0
    %510 = vmatprep.subr.mxu0 0.0
    %511 = vmatpush2.msra.mxu0 0.0
    %512 = vmatprep.subr.mxu0 0.0
    %513 = vmatpush2.msra.mxu0 0.0
    %514 = vmatprep.subr.mxu0 0.0
    %515 = vmatpush2.msra.mxu0 0.0
    %516 = vmatprep.subr.mxu0 0.0
    %517 = vmatpush2.msra.mxu0 0.0
    %518 = vmatprep.subr.mxu0 0.0
    %519 = vmatpush2.msra.mxu0 0.0
    %520 = vmatprep.subr.mxu0 0.0
    %521 = vmatpush2.msra.mxu0 0.0
    %522 = vmatprep.subr.mxu0 0.0
    %523 = vmatpush2.msra.mxu0 0.0
    %524 = vmatprep.subr.mxu0 0.0
    %525 = vmatpush2.msra.mxu0 0.0
    %526 = vmatprep.subr.mxu0 0.0
    %527 = vmatpush2.msra.mxu0 0.0
    %528 = vmatprep.mubr.f32.mxu0 0.0
    %529 = vmatmul.mubr.f32.gmra.mxu0 %v462
    %v530 = vpop.f32.mrf.mxu0
    %v531 = vadd.f32 0.0, %v530
    %v532 = vpop.f32.mrf.mxu0
    %533 = vdwg.mxu0
    %534 = vst.msk [vmem:[#allocation2] sm:$0xff] %vm213, %v458
    %535 = vst.msk [vmem:[#allocation2 + $0x8] sm:$0xff] %vm213, %v531
    %536 = vrot.lane.b32.xlu0 %v200, 112
    %v537 = vpop.permute.xlu0 %536
    %538 = vrot.lane.b32.xlu0 %v200, 48
    %v539 = vpop.permute.xlu0 %538
    %v540 = vsel %vm213, %v537, 0
    %v542 = vsel %vm213, %v539, 0
    %544 = vmatprep.subr.mxu0 0.0
    %545 = vmatpush1.xpose.msra.mxu0 0.0
    %546 = vmatprep.subr.mxu0 0.0
    %547 = vmatpush1.xpose.msra.mxu0 0.0
    %548 = vmatprep.subr.mxu0 0.0
    %549 = vmatpush1.xpose.msra.mxu0 0.0
    %550 = vmatprep.subr.mxu0 0.0
    %551 = vmatpush1.xpose.msra.mxu0 0.0
    %552 = vmatprep.subr.mxu0 0.0
    %553 = vmatpush1.xpose.msra.mxu0 0.0
    %554 = vmatprep.subr.mxu0 0.0
    %555 = vmatpush1.xpose.msra.mxu0 0.0
    %556 = vmatprep.subr.mxu0 0.0
    %557 = vmatpush1.xpose.msra.mxu0 0.0
    %558 = vmatprep.subr.mxu0 0.0
    %559 = vmatpush1.xpose.msra.mxu0 0.0
    %560 = vmatprep.subr.mxu0 0.0
    %561 = vmatpush1.xpose.msra.mxu0 0.0
    %562 = vmatprep.subr.mxu0 0.0
    %563 = vmatpush1.xpose.msra.mxu0 0.0
    %564 = vmatprep.subr.mxu0 0.0
    %565 = vmatpush1.xpose.msra.mxu0 0.0
    %566 = vmatprep.subr.mxu0 0.0
    %567 = vmatpush1.xpose.msra.mxu0 0.0
    %568 = vmatprep.subr.mxu0 0.0
    %569 = vmatpush1.xpose.msra.mxu0 0.0
    %570 = vmatprep.subr.mxu0 0.0
    %571 = vmatpush1.xpose.msra.mxu0 0.0
    %572 = vmatprep.subr.mxu0 0.0
    %573 = vmatpush1.xpose.msra.mxu0 0.0
    %574 = vmatprep.subr.mxu0 0.0
    %575 = vmatpush1.xpose.msra.mxu0 %v542
    %576 = vmatprep.subr.mxu0 0.0
    %577 = vmatpush2.xpose.msra.mxu0 0.0
    %578 = vmatprep.subr.mxu0 0.0
    %579 = vmatpush2.xpose.msra.mxu0 0.0
    %580 = vmatprep.subr.mxu0 0.0
    %581 = vmatpush2.xpose.msra.mxu0 0.0
    %582 = vmatprep.subr.mxu0 0.0
    %583 = vmatpush2.xpose.msra.mxu0 0.0
    %584 = vmatprep.subr.mxu0 0.0
    %585 = vmatpush2.xpose.msra.mxu0 0.0
    %586 = vmatprep.subr.mxu0 0.0
    %587 = vmatpush2.xpose.msra.mxu0 0.0
    %588 = vmatprep.subr.mxu0 0.0
    %589 = vmatpush2.xpose.msra.mxu0 0.0
    %590 = vmatprep.subr.mxu0 0.0
    %591 = vmatpush2.xpose.msra.mxu0 0.0
    %592 = vmatprep.subr.mxu0 0.0
    %593 = vmatpush2.xpose.msra.mxu0 0.0
    %594 = vmatprep.subr.mxu0 0.0
    %595 = vmatpush2.xpose.msra.mxu0 0.0
    %596 = vmatprep.subr.mxu0 0.0
    %597 = vmatpush2.xpose.msra.mxu0 0.0
    %598 = vmatprep.subr.mxu0 0.0
    %599 = vmatpush2.xpose.msra.mxu0 0.0
    %600 = vmatprep.subr.mxu0 0.0
    %601 = vmatpush2.xpose.msra.mxu0 0.0
    %602 = vmatprep.subr.mxu0 0.0
    %603 = vmatpush2.xpose.msra.mxu0 0.0
    %604 = vmatprep.subr.mxu0 0.0
    %605 = vmatpush2.xpose.msra.mxu0 0.0
    %606 = vmatprep.subr.mxu0 0.0
    %607 = vmatpush2.xpose.msra.mxu0 0.0
    %608 = vmatprep.mubr.f32.mxu0 0.0
    %609 = vmatmul.mubr.f32.gmra.mxu0 %v540
    %v610 = vpop.f32.mrf.mxu0
    %v611 = vadd.f32 0.0, %v610
    %v612 = vpop.f32.mrf.mxu0
    %613 = vdwg.mxu0
    %614 = vrot.lane.b32.xlu0 %v206, 112
    %v615 = vpop.permute.xlu0 %614
    %616 = vrot.lane.b32.xlu0 %v206, 48
    %v617 = vpop.permute.xlu0 %616
    %v618 = vsel %vm213, %v615, 0
    %v620 = vsel %vm213, %v617, 0
    %622 = vmatprep.subr.mxu0 0.0
    %623 = vmatpush1.xpose.msra.mxu0 0.0
    %624 = vmatprep.subr.mxu0 0.0
    %625 = vmatpush1.xpose.msra.mxu0 0.0
    %626 = vmatprep.subr.mxu0 0.0
    %627 = vmatpush1.xpose.msra.mxu0 0.0
    %628 = vmatprep.subr.mxu0 0.0
    %629 = vmatpush1.xpose.msra.mxu0 0.0
    %630 = vmatprep.subr.mxu0 0.0
    %631 = vmatpush1.xpose.msra.mxu0 0.0
    %632 = vmatprep.subr.mxu0 0.0
    %633 = vmatpush1.xpose.msra.mxu0 0.0
    %634 = vmatprep.subr.mxu0 0.0
    %635 = vmatpush1.xpose.msra.mxu0 0.0
    %636 = vmatprep.subr.mxu0 0.0
    %637 = vmatpush1.xpose.msra.mxu0 0.0
    %638 = vmatprep.subr.mxu0 0.0
    %639 = vmatpush1.xpose.msra.mxu0 0.0
    %640 = vmatprep.subr.mxu0 0.0
    %641 = vmatpush1.xpose.msra.mxu0 0.0
    %642 = vmatprep.subr.mxu0 0.0
    %643 = vmatpush1.xpose.msra.mxu0 0.0
    %644 = vmatprep.subr.mxu0 0.0
    %645 = vmatpush1.xpose.msra.mxu0 0.0
    %646 = vmatprep.subr.mxu0 0.0
    %647 = vmatpush1.xpose.msra.mxu0 0.0
    %648 = vmatprep.subr.mxu0 0.0
    %649 = vmatpush1.xpose.msra.mxu0 0.0
    %650 = vmatprep.subr.mxu0 0.0
    %651 = vmatpush1.xpose.msra.mxu0 0.0
    %652 = vmatprep.subr.mxu0 0.0
    %653 = vmatpush1.xpose.msra.mxu0 %v620
    %654 = vmatprep.subr.mxu0 0.0
    %655 = vmatpush2.xpose.msra.mxu0 0.0
    %656 = vmatprep.subr.mxu0 0.0
    %657 = vmatpush2.xpose.msra.mxu0 0.0
    %658 = vmatprep.subr.mxu0 0.0
    %659 = vmatpush2.xpose.msra.mxu0 0.0
    %660 = vmatprep.subr.mxu0 0.0
    %661 = vmatpush2.xpose.msra.mxu0 0.0
    %662 = vmatprep.subr.mxu0 0.0
    %663 = vmatpush2.xpose.msra.mxu0 0.0
    %664 = vmatprep.subr.mxu0 0.0
    %665 = vmatpush2.xpose.msra.mxu0 0.0
    %666 = vmatprep.subr.mxu0 0.0
    %667 = vmatpush2.xpose.msra.mxu0 0.0
    %668 = vmatprep.subr.mxu0 0.0
    %669 = vmatpush2.xpose.msra.mxu0 0.0
    %670 = vmatprep.subr.mxu0 0.0
    %671 = vmatpush2.xpose.msra.mxu0 0.0
    %672 = vmatprep.subr.mxu0 0.0
    %673 = vmatpush2.xpose.msra.mxu0 0.0
    %674 = vmatprep.subr.mxu0 0.0
    %675 = vmatpush2.xpose.msra.mxu0 0.0
    %676 = vmatprep.subr.mxu0 0.0
    %677 = vmatpush2.xpose.msra.mxu0 0.0
    %678 = vmatprep.subr.mxu0 0.0
    %679 = vmatpush2.xpose.msra.mxu0 0.0
    %680 = vmatprep.subr.mxu0 0.0
    %681 = vmatpush2.xpose.msra.mxu0 0.0
    %682 = vmatprep.subr.mxu0 0.0
    %683 = vmatpush2.xpose.msra.mxu0 0.0
    %684 = vmatprep.subr.mxu0 0.0
    %685 = vmatpush2.xpose.msra.mxu0 0.0
    %686 = vmatprep.mubr.f32.mxu0 0.0
    %687 = vmatmul.mubr.f32.gmra.mxu0 %v618
    %v688 = vpop.f32.mrf.mxu0
    %v689 = vadd.f32 0.0, %v688
    %v690 = vpop.f32.mrf.mxu0
    %691 = vdwg.mxu0
    %v692 = vsel %vm365, %v611, -inf
    %693 = vmax.xlane.f32.xlu0 %v692
    %v694 = vpop.xlane.xlu0 %693
    %v695 = vsel %vm365, %v689, -inf
    %696 = vmax.xlane.f32.xlu0 %v695
    %v697 = vpop.xlane.xlu0 %696
    %v698 = vsub.f32 %v611, %v694
    %v699 = vsub.f32 %v689, %v697
    %v700 = vmul.f32 %v698, 1.442695
    %v701 = vpow.pop %v700
    %v702 = vmul.f32 %v699, 1.442695
    %v703 = vpow.pop %v702
    %v704 = vsel %vm365, %v701, 0.0
    %705 = vadd.xlane.f32.xlu0 %v704
    %v706 = vpop.xlane.xlu0 %705
    %v707 = vsel %vm365, %v703, 0.0
    %708 = vadd.xlane.f32.xlu0 %v707
    %v709 = vpop.xlane.xlu0 %708
    %v710 = vrcp.pop %v706
    %v711 = vrcp.pop %v709
    %v712 = vmul.f32 %v701, %v710
    %v713 = vmul.f32 %v703, %v711
    %715 = vrot.lane.b32.xlu0 %v202, 112
    %v716 = vpop.permute.xlu0 %715
    %v719 = vsel %vm365, %v712, 0
    %721 = vmatprep.subr.mxu0 0.0
    %722 = vmatpush1.msra.mxu0 0.0
    %723 = vmatprep.subr.mxu0 0.0
    %724 = vmatpush1.msra.mxu0 0.0
    %725 = vmatprep.subr.mxu0 0.0
    %726 = vmatpush1.msra.mxu0 0.0
    %727 = vmatprep.subr.mxu0 0.0
    %728 = vmatpush1.msra.mxu0 0.0
    %729 = vmatprep.subr.mxu0 0.0
    %730 = vmatpush1.msra.mxu0 0.0
    %731 = vmatprep.subr.mxu0 0.0
    %732 = vmatpush1.msra.mxu0 0.0
    %733 = vmatprep.subr.mxu0 0.0
    %734 = vmatpush1.msra.mxu0 0.0
    %735 = vmatprep.subr.mxu0 0.0
    %736 = vmatpush1.msra.mxu0 0.0
    %737 = vmatprep.subr.mxu0 0.0
    %738 = vmatpush1.msra.mxu0 0.0
    %739 = vmatprep.subr.mxu0 0.0
    %740 = vmatpush1.msra.mxu0 0.0
    %741 = vmatprep.subr.mxu0 0.0
    %742 = vmatpush1.msra.mxu0 0.0
    %743 = vmatprep.subr.mxu0 0.0
    %744 = vmatpush1.msra.mxu0 0.0
    %745 = vmatprep.subr.mxu0 0.0
    %746 = vmatpush1.msra.mxu0 0.0
    %747 = vmatprep.subr.mxu0 0.0
    %748 = vmatpush1.msra.mxu0 0.0
    %749 = vmatprep.subr.mxu0 0.0
    %750 = vmatpush1.msra.mxu0 0.0
    %751 = vmatprep.subr.mxu0 0.0
    %752 = vmatpush1.msra.mxu0 %v716
    %753 = vmatprep.subr.mxu0 0.0
    %754 = vmatpush2.msra.mxu0 0.0
    %755 = vmatprep.subr.mxu0 0.0
    %756 = vmatpush2.msra.mxu0 0.0
    %757 = vmatprep.subr.mxu0 0.0
    %758 = vmatpush2.msra.mxu0 0.0
    %759 = vmatprep.subr.mxu0 0.0
    %760 = vmatpush2.msra.mxu0 0.0
    %761 = vmatprep.subr.mxu0 0.0
    %762 = vmatpush2.msra.mxu0 0.0
    %763 = vmatprep.subr.mxu0 0.0
    %764 = vmatpush2.msra.mxu0 0.0
    %765 = vmatprep.subr.mxu0 0.0
    %766 = vmatpush2.msra.mxu0 0.0
    %767 = vmatprep.subr.mxu0 0.0
    %768 = vmatpush2.msra.mxu0 0.0
    %769 = vmatprep.subr.mxu0 0.0
    %770 = vmatpush2.msra.mxu0 0.0
    %771 = vmatprep.subr.mxu0 0.0
    %772 = vmatpush2.msra.mxu0 0.0
    %773 = vmatprep.subr.mxu0 0.0
    %774 = vmatpush2.msra.mxu0 0.0
    %775 = vmatprep.subr.mxu0 0.0
    %776 = vmatpush2.msra.mxu0 0.0
    %777 = vmatprep.subr.mxu0 0.0
    %778 = vmatpush2.msra.mxu0 0.0
    %779 = vmatprep.subr.mxu0 0.0
    %780 = vmatpush2.msra.mxu0 0.0
    %781 = vmatprep.subr.mxu0 0.0
    %782 = vmatpush2.msra.mxu0 0.0
    %783 = vmatprep.subr.mxu0 0.0
    %784 = vmatpush2.msra.mxu0 0.0
    %785 = vmatprep.mubr.f32.mxu0 0.0
    %786 = vmatmul.mubr.f32.gmra.mxu0 %v719
    %v787 = vpop.f32.mrf.mxu0
    %v788 = vadd.f32 0.0, %v787
    %v789 = vpop.f32.mrf.mxu0
    %790 = vdwg.mxu0
    %792 = vrot.lane.b32.xlu0 %v208, 112
    %v793 = vpop.permute.xlu0 %792
    %v796 = vsel %vm365, %v713, 0
    %798 = vmatprep.subr.mxu0 0.0
    %799 = vmatpush1.msra.mxu0 0.0
    %800 = vmatprep.subr.mxu0 0.0
    %801 = vmatpush1.msra.mxu0 0.0
    %802 = vmatprep.subr.mxu0 0.0
    %803 = vmatpush1.msra.mxu0 0.0
    %804 = vmatprep.subr.mxu0 0.0
    %805 = vmatpush1.msra.mxu0 0.0
    %806 = vmatprep.subr.mxu0 0.0
    %807 = vmatpush1.msra.mxu0 0.0
    %808 = vmatprep.subr.mxu0 0.0
    %809 = vmatpush1.msra.mxu0 0.0
    %810 = vmatprep.subr.mxu0 0.0
    %811 = vmatpush1.msra.mxu0 0.0
    %812 = vmatprep.subr.mxu0 0.0
    %813 = vmatpush1.msra.mxu0 0.0
    %814 = vmatprep.subr.mxu0 0.0
    %815 = vmatpush1.msra.mxu0 0.0
    %816 = vmatprep.subr.mxu0 0.0
    %817 = vmatpush1.msra.mxu0 0.0
    %818 = vmatprep.subr.mxu0 0.0
    %819 = vmatpush1.msra.mxu0 0.0
    %820 = vmatprep.subr.mxu0 0.0
    %821 = vmatpush1.msra.mxu0 0.0
    %822 = vmatprep.subr.mxu0 0.0
    %823 = vmatpush1.msra.mxu0 0.0
    %824 = vmatprep.subr.mxu0 0.0
    %825 = vmatpush1.msra.mxu0 0.0
    %826 = vmatprep.subr.mxu0 0.0
    %827 = vmatpush1.msra.mxu0 0.0
    %828 = vmatprep.subr.mxu0 0.0
    %829 = vmatpush1.msra.mxu0 %v793
    %830 = vmatprep.subr.mxu0 0.0
    %831 = vmatpush2.msra.mxu0 0.0
    %832 = vmatprep.subr.mxu0 0.0
    %833 = vmatpush2.msra.mxu0 0.0
    %834 = vmatprep.subr.mxu0 0.0
    %835 = vmatpush2.msra.mxu0 0.0
    %836 = vmatprep.subr.mxu0 0.0
    %837 = vmatpush2.msra.mxu0 0.0
    %838 = vmatprep.subr.mxu0 0.0
    %839 = vmatpush2.msra.mxu0 0.0
    %840 = vmatprep.subr.mxu0 0.0
    %841 = vmatpush2.msra.mxu0 0.0
    %842 = vmatprep.subr.mxu0 0.0
    %843 = vmatpush2.msra.mxu0 0.0
    %844 = vmatprep.subr.mxu0 0.0
    %845 = vmatpush2.msra.mxu0 0.0
    %846 = vmatprep.subr.mxu0 0.0
    %847 = vmatpush2.msra.mxu0 0.0
    %848 = vmatprep.subr.mxu0 0.0
    %849 = vmatpush2.msra.mxu0 0.0
    %850 = vmatprep.subr.mxu0 0.0
    %851 = vmatpush2.msra.mxu0 0.0
    %852 = vmatprep.subr.mxu0 0.0
    %853 = vmatpush2.msra.mxu0 0.0
    %854 = vmatprep.subr.mxu0 0.0
    %855 = vmatpush2.msra.mxu0 0.0
    %856 = vmatprep.subr.mxu0 0.0
    %857 = vmatpush2.msra.mxu0 0.0
    %858 = vmatprep.subr.mxu0 0.0
    %859 = vmatpush2.msra.mxu0 0.0
    %860 = vmatprep.subr.mxu0 0.0
    %861 = vmatpush2.msra.mxu0 0.0
    %862 = vmatprep.mubr.f32.mxu0 0.0
    %863 = vmatmul.mubr.f32.gmra.mxu0 %v796
    %v864 = vpop.f32.mrf.mxu0
    %v865 = vadd.f32 0.0, %v864
    %v866 = vpop.f32.mrf.mxu0
    %867 = vdwg.mxu0
    %870 = vrot.lane.b32.xlu0 %v788, 16
    %v871 = vpop.permute.xlu0 %870
    %872 = vrot.lane.b32.xlu0 %v865, 16
    %v873 = vpop.permute.xlu0 %872
    %vm876 = vcmask 261248
    %877 = vst.msk [vmem:[#allocation2] sm:$0xff] %vm876, %v871
    %878 = vst.msk [vmem:[#allocation2 + $0x8] sm:$0xff] %vm876, %v873
    %879 = vrot.lane.b32.xlu0 %v200, 96
    %v880 = vpop.permute.xlu0 %879
    %881 = vrot.lane.b32.xlu0 %v200, 32
    %v882 = vpop.permute.xlu0 %881
    %v883 = vsel %vm213, %v880, 0
    %v885 = vsel %vm213, %v882, 0
    %887 = vmatprep.subr.mxu0 0.0
    %888 = vmatpush1.xpose.msra.mxu0 0.0
    %889 = vmatprep.subr.mxu0 0.0
    %890 = vmatpush1.xpose.msra.mxu0 0.0
    %891 = vmatprep.subr.mxu0 0.0
    %892 = vmatpush1.xpose.msra.mxu0 0.0
    %893 = vmatprep.subr.mxu0 0.0
    %894 = vmatpush1.xpose.msra.mxu0 0.0
    %895 = vmatprep.subr.mxu0 0.0
    %896 = vmatpush1.xpose.msra.mxu0 0.0
    %897 = vmatprep.subr.mxu0 0.0
    %898 = vmatpush1.xpose.msra.mxu0 0.0
    %899 = vmatprep.subr.mxu0 0.0
    %900 = vmatpush1.xpose.msra.mxu0 0.0
    %901 = vmatprep.subr.mxu0 0.0
    %902 = vmatpush1.xpose.msra.mxu0 0.0
    %903 = vmatprep.subr.mxu0 0.0
    %904 = vmatpush1.xpose.msra.mxu0 0.0
    %905 = vmatprep.subr.mxu0 0.0
    %906 = vmatpush1.xpose.msra.mxu0 0.0
    %907 = vmatprep.subr.mxu0 0.0
    %908 = vmatpush1.xpose.msra.mxu0 0.0
    %909 = vmatprep.subr.mxu0 0.0
    %910 = vmatpush1.xpose.msra.mxu0 0.0
    %911 = vmatprep.subr.mxu0 0.0
    %912 = vmatpush1.xpose.msra.mxu0 0.0
    %913 = vmatprep.subr.mxu0 0.0
    %914 = vmatpush1.xpose.msra.mxu0 0.0
    %915 = vmatprep.subr.mxu0 0.0
    %916 = vmatpush1.xpose.msra.mxu0 0.0
    %917 = vmatprep.subr.mxu0 0.0
    %918 = vmatpush1.xpose.msra.mxu0 %v885
    %919 = vmatprep.subr.mxu0 0.0
    %920 = vmatpush2.xpose.msra.mxu0 0.0
    %921 = vmatprep.subr.mxu0 0.0
    %922 = vmatpush2.xpose.msra.mxu0 0.0
    %923 = vmatprep.subr.mxu0 0.0
    %924 = vmatpush2.xpose.msra.mxu0 0.0
    %925 = vmatprep.subr.mxu0 0.0
    %926 = vmatpush2.xpose.msra.mxu0 0.0
    %927 = vmatprep.subr.mxu0 0.0
    %928 = vmatpush2.xpose.msra.mxu0 0.0
    %929 = vmatprep.subr.mxu0 0.0
    %930 = vmatpush2.xpose.msra.mxu0 0.0
    %931 = vmatprep.subr.mxu0 0.0
    %932 = vmatpush2.xpose.msra.mxu0 0.0
    %933 = vmatprep.subr.mxu0 0.0
    %934 = vmatpush2.xpose.msra.mxu0 0.0
    %935 = vmatprep.subr.mxu0 0.0
    %936 = vmatpush2.xpose.msra.mxu0 0.0
    %937 = vmatprep.subr.mxu0 0.0
    %938 = vmatpush2.xpose.msra.mxu0 0.0
    %939 = vmatprep.subr.mxu0 0.0
    %940 = vmatpush2.xpose.msra.mxu0 0.0
    %941 = vmatprep.subr.mxu0 0.0
    %942 = vmatpush2.xpose.msra.mxu0 0.0
    %943 = vmatprep.subr.mxu0 0.0
    %944 = vmatpush2.xpose.msra.mxu0 0.0
    %945 = vmatprep.subr.mxu0 0.0
    %946 = vmatpush2.xpose.msra.mxu0 0.0
    %947 = vmatprep.subr.mxu0 0.0
    %948 = vmatpush2.xpose.msra.mxu0 0.0
    %949 = vmatprep.subr.mxu0 0.0
    %950 = vmatpush2.xpose.msra.mxu0 0.0
    %951 = vmatprep.mubr.f32.mxu0 0.0
    %952 = vmatmul.mubr.f32.gmra.mxu0 %v883
    %v953 = vpop.f32.mrf.mxu0
    %v954 = vadd.f32 0.0, %v953
    %v955 = vpop.f32.mrf.mxu0
    %956 = vdwg.mxu0
    %957 = vrot.lane.b32.xlu0 %v206, 96
    %v958 = vpop.permute.xlu0 %957
    %959 = vrot.lane.b32.xlu0 %v206, 32
    %v960 = vpop.permute.xlu0 %959
    %v961 = vsel %vm213, %v958, 0
    %v963 = vsel %vm213, %v960, 0
    %965 = vmatprep.subr.mxu0 0.0
    %966 = vmatpush1.xpose.msra.mxu0 0.0
    %967 = vmatprep.subr.mxu0 0.0
    %968 = vmatpush1.xpose.msra.mxu0 0.0
    %969 = vmatprep.subr.mxu0 0.0
    %970 = vmatpush1.xpose.msra.mxu0 0.0
    %971 = vmatprep.subr.mxu0 0.0
    %972 = vmatpush1.xpose.msra.mxu0 0.0
    %973 = vmatprep.subr.mxu0 0.0
    %974 = vmatpush1.xpose.msra.mxu0 0.0
    %975 = vmatprep.subr.mxu0 0.0
    %976 = vmatpush1.xpose.msra.mxu0 0.0
    %977 = vmatprep.subr.mxu0 0.0
    %978 = vmatpush1.xpose.msra.mxu0 0.0
    %979 = vmatprep.subr.mxu0 0.0
    %980 = vmatpush1.xpose.msra.mxu0 0.0
    %981 = vmatprep.subr.mxu0 0.0
    %982 = vmatpush1.xpose.msra.mxu0 0.0
    %983 = vmatprep.subr.mxu0 0.0
    %984 = vmatpush1.xpose.msra.mxu0 0.0
    %985 = vmatprep.subr.mxu0 0.0
    %986 = vmatpush1.xpose.msra.mxu0 0.0
    %987 = vmatprep.subr.mxu0 0.0
    %988 = vmatpush1.xpose.msra.mxu0 0.0
    %989 = vmatprep.subr.mxu0 0.0
    %990 = vmatpush1.xpose.msra.mxu0 0.0
    %991 = vmatprep.subr.mxu0 0.0
    %992 = vmatpush1.xpose.msra.mxu0 0.0
    %993 = vmatprep.subr.mxu0 0.0
    %994 = vmatpush1.xpose.msra.mxu0 0.0
    %995 = vmatprep.subr.mxu0 0.0
    %996 = vmatpush1.xpose.msra.mxu0 %v963
    %997 = vmatprep.subr.mxu0 0.0
    %998 = vmatpush2.xpose.msra.mxu0 0.0
    %999 = vmatprep.subr.mxu0 0.0
    %1000 = vmatpush2.xpose.msra.mxu0 0.0
    %1001 = vmatprep.subr.mxu0 0.0
    %1002 = vmatpush2.xpose.msra.mxu0 0.0
    %1003 = vmatprep.subr.mxu0 0.0
    %1004 = vmatpush2.xpose.msra.mxu0 0.0
    %1005 = vmatprep.subr.mxu0 0.0
    %1006 = vmatpush2.xpose.msra.mxu0 0.0
    %1007 = vmatprep.subr.mxu0 0.0
    %1008 = vmatpush2.xpose.msra.mxu0 0.0
    %1009 = vmatprep.subr.mxu0 0.0
    %1010 = vmatpush2.xpose.msra.mxu0 0.0
    %1011 = vmatprep.subr.mxu0 0.0
    %1012 = vmatpush2.xpose.msra.mxu0 0.0
    %1013 = vmatprep.subr.mxu0 0.0
    %1014 = vmatpush2.xpose.msra.mxu0 0.0
    %1015 = vmatprep.subr.mxu0 0.0
    %1016 = vmatpush2.xpose.msra.mxu0 0.0
    %1017 = vmatprep.subr.mxu0 0.0
    %1018 = vmatpush2.xpose.msra.mxu0 0.0
    %1019 = vmatprep.subr.mxu0 0.0
    %1020 = vmatpush2.xpose.msra.mxu0 0.0
    %1021 = vmatprep.subr.mxu0 0.0
    %1022 = vmatpush2.xpose.msra.mxu0 0.0
    %1023 = vmatprep.subr.mxu0 0.0
    %1024 = vmatpush2.xpose.msra.mxu0 0.0
    %1025 = vmatprep.subr.mxu0 0.0
    %1026 = vmatpush2.xpose.msra.mxu0 0.0
    %1027 = vmatprep.subr.mxu0 0.0
    %1028 = vmatpush2.xpose.msra.mxu0 0.0
    %1029 = vmatprep.mubr.f32.mxu0 0.0
    %1030 = vmatmul.mubr.f32.gmra.mxu0 %v961
    %v1031 = vpop.f32.mrf.mxu0
    %v1032 = vadd.f32 0.0, %v1031
    %v1033 = vpop.f32.mrf.mxu0
    %1034 = vdwg.mxu0
    %v1035 = vsel %vm365, %v954, -inf
    %1036 = vmax.xlane.f32.xlu0 %v1035
    %v1037 = vpop.xlane.xlu0 %1036
    %v1038 = vsel %vm365, %v1032, -inf
    %1039 = vmax.xlane.f32.xlu0 %v1038
    %v1040 = vpop.xlane.xlu0 %1039
    %v1041 = vsub.f32 %v954, %v1037
    %v1042 = vsub.f32 %v1032, %v1040
    %v1043 = vmul.f32 %v1041, 1.442695
    %v1044 = vpow.pop %v1043
    %v1045 = vmul.f32 %v1042, 1.442695
    %v1046 = vpow.pop %v1045
    %v1047 = vsel %vm365, %v1044, 0.0
    %1048 = vadd.xlane.f32.xlu0 %v1047
    %v1049 = vpop.xlane.xlu0 %1048
    %v1050 = vsel %vm365, %v1046, 0.0
    %1051 = vadd.xlane.f32.xlu0 %v1050
    %v1052 = vpop.xlane.xlu0 %1051
    %v1053 = vrcp.pop %v1049
    %v1054 = vrcp.pop %v1052
    %v1055 = vmul.f32 %v1044, %v1053
    %v1056 = vmul.f32 %v1046, %v1054
    %1057 = vrot.lane.b32.xlu0 %v202, 96
    %v1058 = vpop.permute.xlu0 %1057
    %v1061 = vsel %vm365, %v1055, 0
    %1063 = vmatprep.subr.mxu0 0.0
    %1064 = vmatpush1.msra.mxu0 0.0
    %1065 = vmatprep.subr.mxu0 0.0
    %1066 = vmatpush1.msra.mxu0 0.0
    %1067 = vmatprep.subr.mxu0 0.0
    %1068 = vmatpush1.msra.mxu0 0.0
    %1069 = vmatprep.subr.mxu0 0.0
    %1070 = vmatpush1.msra.mxu0 0.0
    %1071 = vmatprep.subr.mxu0 0.0
    %1072 = vmatpush1.msra.mxu0 0.0
    %1073 = vmatprep.subr.mxu0 0.0
    %1074 = vmatpush1.msra.mxu0 0.0
    %1075 = vmatprep.subr.mxu0 0.0
    %1076 = vmatpush1.msra.mxu0 0.0
    %1077 = vmatprep.subr.mxu0 0.0
    %1078 = vmatpush1.msra.mxu0 0.0
    %1079 = vmatprep.subr.mxu0 0.0
    %1080 = vmatpush1.msra.mxu0 0.0
    %1081 = vmatprep.subr.mxu0 0.0
    %1082 = vmatpush1.msra.mxu0 0.0
    %1083 = vmatprep.subr.mxu0 0.0
    %1084 = vmatpush1.msra.mxu0 0.0
    %1085 = vmatprep.subr.mxu0 0.0
    %1086 = vmatpush1.msra.mxu0 0.0
    %1087 = vmatprep.subr.mxu0 0.0
    %1088 = vmatpush1.msra.mxu0 0.0
    %1089 = vmatprep.subr.mxu0 0.0
    %1090 = vmatpush1.msra.mxu0 0.0
    %1091 = vmatprep.subr.mxu0 0.0
    %1092 = vmatpush1.msra.mxu0 0.0
    %1093 = vmatprep.subr.mxu0 0.0
    %1094 = vmatpush1.msra.mxu0 %v1058
    %1095 = vmatprep.subr.mxu0 0.0
    %1096 = vmatpush2.msra.mxu0 0.0
    %1097 = vmatprep.subr.mxu0 0.0
    %1098 = vmatpush2.msra.mxu0 0.0
    %1099 = vmatprep.subr.mxu0 0.0
    %1100 = vmatpush2.msra.mxu0 0.0
    %1101 = vmatprep.subr.mxu0 0.0
    %1102 = vmatpush2.msra.mxu0 0.0
    %1103 = vmatprep.subr.mxu0 0.0
    %1104 = vmatpush2.msra.mxu0 0.0
    %1105 = vmatprep.subr.mxu0 0.0
    %1106 = vmatpush2.msra.mxu0 0.0
    %1107 = vmatprep.subr.mxu0 0.0
    %1108 = vmatpush2.msra.mxu0 0.0
    %1109 = vmatprep.subr.mxu0 0.0
    %1110 = vmatpush2.msra.mxu0 0.0
    %1111 = vmatprep.subr.mxu0 0.0
    %1112 = vmatpush2.msra.mxu0 0.0
    %1113 = vmatprep.subr.mxu0 0.0
    %1114 = vmatpush2.msra.mxu0 0.0
    %1115 = vmatprep.subr.mxu0 0.0
    %1116 = vmatpush2.msra.mxu0 0.0
    %1117 = vmatprep.subr.mxu0 0.0
    %1118 = vmatpush2.msra.mxu0 0.0
    %1119 = vmatprep.subr.mxu0 0.0
    %1120 = vmatpush2.msra.mxu0 0.0
    %1121 = vmatprep.subr.mxu0 0.0
    %1122 = vmatpush2.msra.mxu0 0.0
    %1123 = vmatprep.subr.mxu0 0.0
    %1124 = vmatpush2.msra.mxu0 0.0
    %1125 = vmatprep.subr.mxu0 0.0
    %1126 = vmatpush2.msra.mxu0 0.0
    %1127 = vmatprep.mubr.f32.mxu0 0.0
    %1128 = vmatmul.mubr.f32.gmra.mxu0 %v1061
    %v1129 = vpop.f32.mrf.mxu0
    %v1130 = vadd.f32 0.0, %v1129
    %v1131 = vpop.f32.mrf.mxu0
    %1132 = vdwg.mxu0
    %1133 = vrot.lane.b32.xlu0 %v208, 96
    %v1134 = vpop.permute.xlu0 %1133
    %v1137 = vsel %vm365, %v1056, 0
    %1139 = vmatprep.subr.mxu0 0.0
    %1140 = vmatpush1.msra.mxu0 0.0
    %1141 = vmatprep.subr.mxu0 0.0
    %1142 = vmatpush1.msra.mxu0 0.0
    %1143 = vmatprep.subr.mxu0 0.0
    %1144 = vmatpush1.msra.mxu0 0.0
    %1145 = vmatprep.subr.mxu0 0.0
    %1146 = vmatpush1.msra.mxu0 0.0
    %1147 = vmatprep.subr.mxu0 0.0
    %1148 = vmatpush1.msra.mxu0 0.0
    %1149 = vmatprep.subr.mxu0 0.0
    %1150 = vmatpush1.msra.mxu0 0.0
    %1151 = vmatprep.subr.mxu0 0.0
    %1152 = vmatpush1.msra.mxu0 0.0
    %1153 = vmatprep.subr.mxu0 0.0
    %1154 = vmatpush1.msra.mxu0 0.0
    %1155 = vmatprep.subr.mxu0 0.0
    %1156 = vmatpush1.msra.mxu0 0.0
    %1157 = vmatprep.subr.mxu0 0.0
    %1158 = vmatpush1.msra.mxu0 0.0
    %1159 = vmatprep.subr.mxu0 0.0
    %1160 = vmatpush1.msra.mxu0 0.0
    %1161 = vmatprep.subr.mxu0 0.0
    %1162 = vmatpush1.msra.mxu0 0.0
    %1163 = vmatprep.subr.mxu0 0.0
    %1164 = vmatpush1.msra.mxu0 0.0
    %1165 = vmatprep.subr.mxu0 0.0
    %1166 = vmatpush1.msra.mxu0 0.0
    %1167 = vmatprep.subr.mxu0 0.0
    %1168 = vmatpush1.msra.mxu0 0.0
    %1169 = vmatprep.subr.mxu0 0.0
    %1170 = vmatpush1.msra.mxu0 %v1134
    %1171 = vmatprep.subr.mxu0 0.0
    %1172 = vmatpush2.msra.mxu0 0.0
    %1173 = vmatprep.subr.mxu0 0.0
    %1174 = vmatpush2.msra.mxu0 0.0
    %1175 = vmatprep.subr.mxu0 0.0
    %1176 = vmatpush2.msra.mxu0 0.0
    %1177 = vmatprep.subr.mxu0 0.0
    %1178 = vmatpush2.msra.mxu0 0.0
    %1179 = vmatprep.subr.mxu0 0.0
    %1180 = vmatpush2.msra.mxu0 0.0
    %1181 = vmatprep.subr.mxu0 0.0
    %1182 = vmatpush2.msra.mxu0 0.0
    %1183 = vmatprep.subr.mxu0 0.0
    %1184 = vmatpush2.msra.mxu0 0.0
    %1185 = vmatprep.subr.mxu0 0.0
    %1186 = vmatpush2.msra.mxu0 0.0
    %1187 = vmatprep.subr.mxu0 0.0
    %1188 = vmatpush2.msra.mxu0 0.0
    %1189 = vmatprep.subr.mxu0 0.0
    %1190 = vmatpush2.msra.mxu0 0.0
    %1191 = vmatprep.subr.mxu0 0.0
    %1192 = vmatpush2.msra.mxu0 0.0
    %1193 = vmatprep.subr.mxu0 0.0
    %1194 = vmatpush2.msra.mxu0 0.0
    %1195 = vmatprep.subr.mxu0 0.0
    %1196 = vmatpush2.msra.mxu0 0.0
    %1197 = vmatprep.subr.mxu0 0.0
    %1198 = vmatpush2.msra.mxu0 0.0
    %1199 = vmatprep.subr.mxu0 0.0
    %1200 = vmatpush2.msra.mxu0 0.0
    %1201 = vmatprep.subr.mxu0 0.0
    %1202 = vmatpush2.msra.mxu0 0.0
    %1203 = vmatprep.mubr.f32.mxu0 0.0
    %1204 = vmatmul.mubr.f32.gmra.mxu0 %v1137
    %v1205 = vpop.f32.mrf.mxu0
    %v1206 = vadd.f32 0.0, %v1205
    %v1207 = vpop.f32.mrf.mxu0
    %1208 = vdwg.mxu0
    %1211 = vrot.lane.b32.xlu0 %v1130, 32
    %v1212 = vpop.permute.xlu0 %1211
    %1213 = vrot.lane.b32.xlu0 %v1206, 32
    %v1214 = vpop.permute.xlu0 %1213
    %vm1217 = vcmask 392448
    %1218 = vst.msk [vmem:[#allocation2] sm:$0xff] %vm1217, %v1212
    %1219 = vst.msk [vmem:[#allocation2 + $0x8] sm:$0xff] %vm1217, %v1214
    %1220 = vrot.lane.b32.xlu0 %v200, 80
    %v1221 = vpop.permute.xlu0 %1220
    %1222 = vrot.lane.b32.xlu0 %v200, 16
    %v1223 = vpop.permute.xlu0 %1222
    %v1224 = vsel %vm213, %v1221, 0
    %v1226 = vsel %vm213, %v1223, 0
    %1228 = vmatprep.subr.mxu0 0.0
    %1229 = vmatpush1.xpose.msra.mxu0 0.0
    %1230 = vmatprep.subr.mxu0 0.0
    %1231 = vmatpush1.xpose.msra.mxu0 0.0
    %1232 = vmatprep.subr.mxu0 0.0
    %1233 = vmatpush1.xpose.msra.mxu0 0.0
    %1234 = vmatprep.subr.mxu0 0.0
    %1235 = vmatpush1.xpose.msra.mxu0 0.0
    %1236 = vmatprep.subr.mxu0 0.0
    %1237 = vmatpush1.xpose.msra.mxu0 0.0
    %1238 = vmatprep.subr.mxu0 0.0
    %1239 = vmatpush1.xpose.msra.mxu0 0.0
    %1240 = vmatprep.subr.mxu0 0.0
    %1241 = vmatpush1.xpose.msra.mxu0 0.0
    %1242 = vmatprep.subr.mxu0 0.0
    %1243 = vmatpush1.xpose.msra.mxu0 0.0
    %1244 = vmatprep.subr.mxu0 0.0
    %1245 = vmatpush1.xpose.msra.mxu0 0.0
    %1246 = vmatprep.subr.mxu0 0.0
    %1247 = vmatpush1.xpose.msra.mxu0 0.0
    %1248 = vmatprep.subr.mxu0 0.0
    %1249 = vmatpush1.xpose.msra.mxu0 0.0
    %1250 = vmatprep.subr.mxu0 0.0
    %1251 = vmatpush1.xpose.msra.mxu0 0.0
    %1252 = vmatprep.subr.mxu0 0.0
    %1253 = vmatpush1.xpose.msra.mxu0 0.0
    %1254 = vmatprep.subr.mxu0 0.0
    %1255 = vmatpush1.xpose.msra.mxu0 0.0
    %1256 = vmatprep.subr.mxu0 0.0
    %1257 = vmatpush1.xpose.msra.mxu0 0.0
    %1258 = vmatprep.subr.mxu0 0.0
    %1259 = vmatpush1.xpose.msra.mxu0 %v1226
    %1260 = vmatprep.subr.mxu0 0.0
    %1261 = vmatpush2.xpose.msra.mxu0 0.0
    %1262 = vmatprep.subr.mxu0 0.0
    %1263 = vmatpush2.xpose.msra.mxu0 0.0
    %1264 = vmatprep.subr.mxu0 0.0
    %1265 = vmatpush2.xpose.msra.mxu0 0.0
    %1266 = vmatprep.subr.mxu0 0.0
    %1267 = vmatpush2.xpose.msra.mxu0 0.0
    %1268 = vmatprep.subr.mxu0 0.0
    %1269 = vmatpush2.xpose.msra.mxu0 0.0
    %1270 = vmatprep.subr.mxu0 0.0
    %1271 = vmatpush2.xpose.msra.mxu0 0.0
    %1272 = vmatprep.subr.mxu0 0.0
    %1273 = vmatpush2.xpose.msra.mxu0 0.0
    %1274 = vmatprep.subr.mxu0 0.0
    %1275 = vmatpush2.xpose.msra.mxu0 0.0
    %1276 = vmatprep.subr.mxu0 0.0
    %1277 = vmatpush2.xpose.msra.mxu0 0.0
    %1278 = vmatprep.subr.mxu0 0.0
    %1279 = vmatpush2.xpose.msra.mxu0 0.0
    %1280 = vmatprep.subr.mxu0 0.0
    %1281 = vmatpush2.xpose.msra.mxu0 0.0
    %1282 = vmatprep.subr.mxu0 0.0
    %1283 = vmatpush2.xpose.msra.mxu0 0.0
    %1284 = vmatprep.subr.mxu0 0.0
    %1285 = vmatpush2.xpose.msra.mxu0 0.0
    %1286 = vmatprep.subr.mxu0 0.0
    %1287 = vmatpush2.xpose.msra.mxu0 0.0
    %1288 = vmatprep.subr.mxu0 0.0
    %1289 = vmatpush2.xpose.msra.mxu0 0.0
    %1290 = vmatprep.subr.mxu0 0.0
    %1291 = vmatpush2.xpose.msra.mxu0 0.0
    %1292 = vmatprep.mubr.f32.mxu0 0.0
    %1293 = vmatmul.mubr.f32.gmra.mxu0 %v1224
    %v1294 = vpop.f32.mrf.mxu0
    %v1295 = vadd.f32 0.0, %v1294
    %v1296 = vpop.f32.mrf.mxu0
    %1297 = vdwg.mxu0
    %1298 = vrot.lane.b32.xlu0 %v206, 80
    %v1299 = vpop.permute.xlu0 %1298
    %1300 = vrot.lane.b32.xlu0 %v206, 16
    %v1301 = vpop.permute.xlu0 %1300
    %v1302 = vsel %vm213, %v1299, 0
    %v1304 = vsel %vm213, %v1301, 0
    %1306 = vmatprep.subr.mxu0 0.0
    %1307 = vmatpush1.xpose.msra.mxu0 0.0
    %1308 = vmatprep.subr.mxu0 0.0
    %1309 = vmatpush1.xpose.msra.mxu0 0.0
    %1310 = vmatprep.subr.mxu0 0.0
    %1311 = vmatpush1.xpose.msra.mxu0 0.0
    %1312 = vmatprep.subr.mxu0 0.0
    %1313 = vmatpush1.xpose.msra.mxu0 0.0
    %1314 = vmatprep.subr.mxu0 0.0
    %1315 = vmatpush1.xpose.msra.mxu0 0.0
    %1316 = vmatprep.subr.mxu0 0.0
    %1317 = vmatpush1.xpose.msra.mxu0 0.0
    %1318 = vmatprep.subr.mxu0 0.0
    %1319 = vmatpush1.xpose.msra.mxu0 0.0
    %1320 = vmatprep.subr.mxu0 0.0
    %1321 = vmatpush1.xpose.msra.mxu0 0.0
    %1322 = vmatprep.subr.mxu0 0.0
    %1323 = vmatpush1.xpose.msra.mxu0 0.0
    %1324 = vmatprep.subr.mxu0 0.0
    %1325 = vmatpush1.xpose.msra.mxu0 0.0
    %1326 = vmatprep.subr.mxu0 0.0
    %1327 = vmatpush1.xpose.msra.mxu0 0.0
    %1328 = vmatprep.subr.mxu0 0.0
    %1329 = vmatpush1.xpose.msra.mxu0 0.0
    %1330 = vmatprep.subr.mxu0 0.0
    %1331 = vmatpush1.xpose.msra.mxu0 0.0
    %1332 = vmatprep.subr.mxu0 0.0
    %1333 = vmatpush1.xpose.msra.mxu0 0.0
    %1334 = vmatprep.subr.mxu0 0.0
    %1335 = vmatpush1.xpose.msra.mxu0 0.0
    %1336 = vmatprep.subr.mxu0 0.0
    %1337 = vmatpush1.xpose.msra.mxu0 %v1304
    %1338 = vmatprep.subr.mxu0 0.0
    %1339 = vmatpush2.xpose.msra.mxu0 0.0
    %1340 = vmatprep.subr.mxu0 0.0
    %1341 = vmatpush2.xpose.msra.mxu0 0.0
    %1342 = vmatprep.subr.mxu0 0.0
    %1343 = vmatpush2.xpose.msra.mxu0 0.0
    %1344 = vmatprep.subr.mxu0 0.0
    %1345 = vmatpush2.xpose.msra.mxu0 0.0
    %1346 = vmatprep.subr.mxu0 0.0
    %1347 = vmatpush2.xpose.msra.mxu0 0.0
    %1348 = vmatprep.subr.mxu0 0.0
    %1349 = vmatpush2.xpose.msra.mxu0 0.0
    %1350 = vmatprep.subr.mxu0 0.0
    %1351 = vmatpush2.xpose.msra.mxu0 0.0
    %1352 = vmatprep.subr.mxu0 0.0
    %1353 = vmatpush2.xpose.msra.mxu0 0.0
    %1354 = vmatprep.subr.mxu0 0.0
    %1355 = vmatpush2.xpose.msra.mxu0 0.0
    %1356 = vmatprep.subr.mxu0 0.0
    %1357 = vmatpush2.xpose.msra.mxu0 0.0
    %1358 = vmatprep.subr.mxu0 0.0
    %1359 = vmatpush2.xpose.msra.mxu0 0.0
    %1360 = vmatprep.subr.mxu0 0.0
    %1361 = vmatpush2.xpose.msra.mxu0 0.0
    %1362 = vmatprep.subr.mxu0 0.0
    %1363 = vmatpush2.xpose.msra.mxu0 0.0
    %1364 = vmatprep.subr.mxu0 0.0
    %1365 = vmatpush2.xpose.msra.mxu0 0.0
    %1366 = vmatprep.subr.mxu0 0.0
    %1367 = vmatpush2.xpose.msra.mxu0 0.0
    %1368 = vmatprep.subr.mxu0 0.0
    %1369 = vmatpush2.xpose.msra.mxu0 0.0
    %1370 = vmatprep.mubr.f32.mxu0 0.0
    %1371 = vmatmul.mubr.f32.gmra.mxu0 %v1302
    %v1372 = vpop.f32.mrf.mxu0
    %v1373 = vadd.f32 0.0, %v1372
    %v1374 = vpop.f32.mrf.mxu0
    %1375 = vdwg.mxu0
    %v1376 = vsel %vm365, %v1295, -inf
    %1377 = vmax.xlane.f32.xlu0 %v1376
    %v1378 = vpop.xlane.xlu0 %1377
    %v1379 = vsel %vm365, %v1373, -inf
    %1380 = vmax.xlane.f32.xlu0 %v1379
    %v1381 = vpop.xlane.xlu0 %1380
    %v1382 = vsub.f32 %v1295, %v1378
    %v1383 = vsub.f32 %v1373, %v1381
    %v1384 = vmul.f32 %v1382, 1.442695
    %v1385 = vpow.pop %v1384
    %v1386 = vmul.f32 %v1383, 1.442695
    %v1387 = vpow.pop %v1386
    %v1388 = vsel %vm365, %v1385, 0.0
    %1389 = vadd.xlane.f32.xlu0 %v1388
    %v1390 = vpop.xlane.xlu0 %1389
    %v1391 = vsel %vm365, %v1387, 0.0
    %1392 = vadd.xlane.f32.xlu0 %v1391
    %v1393 = vpop.xlane.xlu0 %1392
    %v1394 = vrcp.pop %v1390
    %v1395 = vrcp.pop %v1393
    %v1396 = vmul.f32 %v1385, %v1394
    %v1397 = vmul.f32 %v1387, %v1395
    %1398 = vrot.lane.b32.xlu0 %v202, 80
    %v1399 = vpop.permute.xlu0 %1398
    %v1402 = vsel %vm365, %v1396, 0
    %1404 = vmatprep.subr.mxu0 0.0
    %1405 = vmatpush1.msra.mxu0 0.0
    %1406 = vmatprep.subr.mxu0 0.0
    %1407 = vmatpush1.msra.mxu0 0.0
    %1408 = vmatprep.subr.mxu0 0.0
    %1409 = vmatpush1.msra.mxu0 0.0
    %1410 = vmatprep.subr.mxu0 0.0
    %1411 = vmatpush1.msra.mxu0 0.0
    %1412 = vmatprep.subr.mxu0 0.0
    %1413 = vmatpush1.msra.mxu0 0.0
    %1414 = vmatprep.subr.mxu0 0.0
    %1415 = vmatpush1.msra.mxu0 0.0
    %1416 = vmatprep.subr.mxu0 0.0
    %1417 = vmatpush1.msra.mxu0 0.0
    %1418 = vmatprep.subr.mxu0 0.0
    %1419 = vmatpush1.msra.mxu0 0.0
    %1420 = vmatprep.subr.mxu0 0.0
    %1421 = vmatpush1.msra.mxu0 0.0
    %1422 = vmatprep.subr.mxu0 0.0
    %1423 = vmatpush1.msra.mxu0 0.0
    %1424 = vmatprep.subr.mxu0 0.0
    %1425 = vmatpush1.msra.mxu0 0.0
    %1426 = vmatprep.subr.mxu0 0.0
    %1427 = vmatpush1.msra.mxu0 0.0
    %1428 = vmatprep.subr.mxu0 0.0
    %1429 = vmatpush1.msra.mxu0 0.0
    %1430 = vmatprep.subr.mxu0 0.0
    %1431 = vmatpush1.msra.mxu0 0.0
    %1432 = vmatprep.subr.mxu0 0.0
    %1433 = vmatpush1.msra.mxu0 0.0
    %1434 = vmatprep.subr.mxu0 0.0
    %1435 = vmatpush1.msra.mxu0 %v1399
    %1436 = vmatprep.subr.mxu0 0.0
    %1437 = vmatpush2.msra.mxu0 0.0
    %1438 = vmatprep.subr.mxu0 0.0
    %1439 = vmatpush2.msra.mxu0 0.0
    %1440 = vmatprep.subr.mxu0 0.0
    %1441 = vmatpush2.msra.mxu0 0.0
    %1442 = vmatprep.subr.mxu0 0.0
    %1443 = vmatpush2.msra.mxu0 0.0
    %1444 = vmatprep.subr.mxu0 0.0
    %1445 = vmatpush2.msra.mxu0 0.0
    %1446 = vmatprep.subr.mxu0 0.0
    %1447 = vmatpush2.msra.mxu0 0.0
    %1448 = vmatprep.subr.mxu0 0.0
    %1449 = vmatpush2.msra.mxu0 0.0
    %1450 = vmatprep.subr.mxu0 0.0
    %1451 = vmatpush2.msra.mxu0 0.0
    %1452 = vmatprep.subr.mxu0 0.0
    %1453 = vmatpush2.msra.mxu0 0.0
    %1454 = vmatprep.subr.mxu0 0.0
    %1455 = vmatpush2.msra.mxu0 0.0
    %1456 = vmatprep.subr.mxu0 0.0
    %1457 = vmatpush2.msra.mxu0 0.0
    %1458 = vmatprep.subr.mxu0 0.0
    %1459 = vmatpush2.msra.mxu0 0.0
    %1460 = vmatprep.subr.mxu0 0.0
    %1461 = vmatpush2.msra.mxu0 0.0
    %1462 = vmatprep.subr.mxu0 0.0
    %1463 = vmatpush2.msra.mxu0 0.0
    %1464 = vmatprep.subr.mxu0 0.0
    %1465 = vmatpush2.msra.mxu0 0.0
    %1466 = vmatprep.subr.mxu0 0.0
    %1467 = vmatpush2.msra.mxu0 0.0
    %1468 = vmatprep.mubr.f32.mxu0 0.0
    %1469 = vmatmul.mubr.f32.gmra.mxu0 %v1402
    %v1470 = vpop.f32.mrf.mxu0
    %v1471 = vadd.f32 0.0, %v1470
    %v1472 = vpop.f32.mrf.mxu0
    %1473 = vdwg.mxu0
    %1474 = vrot.lane.b32.xlu0 %v208, 80
    %v1475 = vpop.permute.xlu0 %1474
    %v1478 = vsel %vm365, %v1397, 0
    %1480 = vmatprep.subr.mxu0 0.0
    %1481 = vmatpush1.msra.mxu0 0.0
    %1482 = vmatprep.subr.mxu0 0.0
    %1483 = vmatpush1.msra.mxu0 0.0
    %1484 = vmatprep.subr.mxu0 0.0
    %1485 = vmatpush1.msra.mxu0 0.0
    %1486 = vmatprep.subr.mxu0 0.0
    %1487 = vmatpush1.msra.mxu0 0.0
    %1488 = vmatprep.subr.mxu0 0.0
    %1489 = vmatpush1.msra.mxu0 0.0
    %1490 = vmatprep.subr.mxu0 0.0
    %1491 = vmatpush1.msra.mxu0 0.0
    %1492 = vmatprep.subr.mxu0 0.0
    %1493 = vmatpush1.msra.mxu0 0.0
    %1494 = vmatprep.subr.mxu0 0.0
    %1495 = vmatpush1.msra.mxu0 0.0
    %1496 = vmatprep.subr.mxu0 0.0
    %1497 = vmatpush1.msra.mxu0 0.0
    %1498 = vmatprep.subr.mxu0 0.0
    %1499 = vmatpush1.msra.mxu0 0.0
    %1500 = vmatprep.subr.mxu0 0.0
    %1501 = vmatpush1.msra.mxu0 0.0
    %1502 = vmatprep.subr.mxu0 0.0
    %1503 = vmatpush1.msra.mxu0 0.0
    %1504 = vmatprep.subr.mxu0 0.0
    %1505 = vmatpush1.msra.mxu0 0.0
    %1506 = vmatprep.subr.mxu0 0.0
    %1507 = vmatpush1.msra.mxu0 0.0
    %1508 = vmatprep.subr.mxu0 0.0
    %1509 = vmatpush1.msra.mxu0 0.0
    %1510 = vmatprep.subr.mxu0 0.0
    %1511 = vmatpush1.msra.mxu0 %v1475
    %1512 = vmatprep.subr.mxu0 0.0
    %1513 = vmatpush2.msra.mxu0 0.0
    %1514 = vmatprep.subr.mxu0 0.0
    %1515 = vmatpush2.msra.mxu0 0.0
    %1516 = vmatprep.subr.mxu0 0.0
    %1517 = vmatpush2.msra.mxu0 0.0
    %1518 = vmatprep.subr.mxu0 0.0
    %1519 = vmatpush2.msra.mxu0 0.0
    %1520 = vmatprep.subr.mxu0 0.0
    %1521 = vmatpush2.msra.mxu0 0.0
    %1522 = vmatprep.subr.mxu0 0.0
    %1523 = vmatpush2.msra.mxu0 0.0
    %1524 = vmatprep.subr.mxu0 0.0
    %1525 = vmatpush2.msra.mxu0 0.0
    %1526 = vmatprep.subr.mxu0 0.0
    %1527 = vmatpush2.msra.mxu0 0.0
    %1528 = vmatprep.subr.mxu0 0.0
    %1529 = vmatpush2.msra.mxu0 0.0
    %1530 = vmatprep.subr.mxu0 0.0
    %1531 = vmatpush2.msra.mxu0 0.0
    %1532 = vmatprep.subr.mxu0 0.0
    %1533 = vmatpush2.msra.mxu0 0.0
    %1534 = vmatprep.subr.mxu0 0.0
    %1535 = vmatpush2.msra.mxu0 0.0
    %1536 = vmatprep.subr.mxu0 0.0
    %1537 = vmatpush2.msra.mxu0 0.0
    %1538 = vmatprep.subr.mxu0 0.0
    %1539 = vmatpush2.msra.mxu0 0.0
    %1540 = vmatprep.subr.mxu0 0.0
    %1541 = vmatpush2.msra.mxu0 0.0
    %1542 = vmatprep.subr.mxu0 0.0
    %1543 = vmatpush2.msra.mxu0 0.0
    %1544 = vmatprep.mubr.f32.mxu0 0.0
    %1545 = vmatmul.mubr.f32.gmra.mxu0 %v1478
    %v1546 = vpop.f32.mrf.mxu0
    %v1547 = vadd.f32 0.0, %v1546
    %v1548 = vpop.f32.mrf.mxu0
    %1549 = vdwg.mxu0
    %1552 = vrot.lane.b32.xlu0 %v1471, 48
    %v1553 = vpop.permute.xlu0 %1552
    %1554 = vrot.lane.b32.xlu0 %v1547, 48
    %v1555 = vpop.permute.xlu0 %1554
    %vm1558 = vcmask 523648
    %1559 = vst.msk [vmem:[#allocation2] sm:$0xff] %vm1558, %v1553
    %1560 = vst.msk [vmem:[#allocation2 + $0x8] sm:$0xff] %vm1558, %v1555
    %v1561 = vld [vmem:[#allocation2] sm:$0xff]
    %v1562 = vld [vmem:[#allocation2 + $0x8] sm:$0xff]
    %v1563 = vld [vmem:[#allocation8] sm:$0xff]
    %v1564 = vld [vmem:[#allocation8 + $0x8] sm:$0xff]
    %v1565 = vld [vmem:[#allocation8 + $0x10] sm:$0xff]
    %v1566 = vld [vmem:[#allocation8 + $0x18] sm:$0xff]
    %v1567 = vld [vmem:[#allocation8 + $0x20] sm:$0xff]
    %v1568 = vld [vmem:[#allocation8 + $0x28] sm:$0xff]
    %v1569 = vld [vmem:[#allocation8 + $0x30] sm:$0xff]
    %v1570 = vld [vmem:[#allocation8 + $0x38] sm:$0xff]
    %v1571 = vld [vmem:[%s4] sm:$0x1]
    %v1573 = vlaneseq
    %v1574 = vshrl.u32 %v1573, 7
    %v1575 = vsub.s32 0, %v1574
    %v1576 = vrot.slane %v1571, %v1575
    %v1579 = vsel %vm126, %v1561, 0
    %v1582 = vsel %vm126, %v1562, 0
    %1584 = vmatprep.subr.mxu0 0.0
    %1585 = vmatpush1.msra.mxu0 0.0
    %1586 = vmatprep.subr.mxu0 0.0
    %1587 = vmatpush1.msra.mxu0 0.0
    %1588 = vmatprep.subr.mxu0 0.0
    %1589 = vmatpush1.msra.mxu0 0.0
    %1590 = vmatprep.subr.mxu0 0.0
    %1591 = vmatpush1.msra.mxu0 0.0
    %1592 = vmatprep.subr.mxu0 0.0
    %1593 = vmatpush1.msra.mxu0 0.0
    %1594 = vmatprep.subr.mxu0 0.0
    %1595 = vmatpush1.msra.mxu0 0.0
    %1596 = vmatprep.subr.mxu0 0.0
    %1597 = vmatpush1.msra.mxu0 0.0
    %1598 = vmatprep.subr.mxu0 0.0
    %1599 = vmatpush1.msra.mxu0 0.0
    %1600 = vmatprep.subr.mxu0 0.0
    %1601 = vmatpush1.msra.mxu0 %v1570
    %1602 = vmatprep.subr.mxu0 0.0
    %1603 = vmatpush1.msra.mxu0 %v1569
    %1604 = vmatprep.subr.mxu0 0.0
    %1605 = vmatpush1.msra.mxu0 %v1568
    %1606 = vmatprep.subr.mxu0 0.0
    %1607 = vmatpush1.msra.mxu0 %v1567
    %1608 = vmatprep.subr.mxu0 0.0
    %1609 = vmatpush1.msra.mxu0 %v1566
    %1610 = vmatprep.subr.mxu0 0.0
    %1611 = vmatpush1.msra.mxu0 %v1565
    %1612 = vmatprep.subr.mxu0 0.0
    %1613 = vmatpush1.msra.mxu0 %v1564
    %1614 = vmatprep.subr.mxu0 0.0
    %1615 = vmatpush1.msra.mxu0 %v1563
    %1616 = vmatprep.subr.mxu0 0.0
    %1617 = vmatpush2.msra.mxu0 0.0
    %1618 = vmatprep.subr.mxu0 0.0
    %1619 = vmatpush2.msra.mxu0 0.0
    %1620 = vmatprep.subr.mxu0 0.0
    %1621 = vmatpush2.msra.mxu0 0.0
    %1622 = vmatprep.subr.mxu0 0.0
    %1623 = vmatpush2.msra.mxu0 0.0
    %1624 = vmatprep.subr.mxu0 0.0
    %1625 = vmatpush2.msra.mxu0 0.0
    %1626 = vmatprep.subr.mxu0 0.0
    %1627 = vmatpush2.msra.mxu0 0.0
    %1628 = vmatprep.subr.mxu0 0.0
    %1629 = vmatpush2.msra.mxu0 0.0
    %1630 = vmatprep.subr.mxu0 0.0
    %1631 = vmatpush2.msra.mxu0 0.0
    %1632 = vmatprep.subr.mxu0 0.0
    %1633 = vmatpush2.msra.mxu0 0.0
    %1634 = vmatprep.subr.mxu0 0.0
    %1635 = vmatpush2.msra.mxu0 0.0
    %1636 = vmatprep.subr.mxu0 0.0
    %1637 = vmatpush2.msra.mxu0 0.0
    %1638 = vmatprep.subr.mxu0 0.0
    %1639 = vmatpush2.msra.mxu0 0.0
    %1640 = vmatprep.subr.mxu0 0.0
    %1641 = vmatpush2.msra.mxu0 0.0
    %1642 = vmatprep.subr.mxu0 0.0
    %1643 = vmatpush2.msra.mxu0 0.0
    %1644 = vmatprep.subr.mxu0 0.0
    %1645 = vmatpush2.msra.mxu0 0.0
    %1646 = vmatprep.subr.mxu0 0.0
    %1647 = vmatpush2.msra.mxu0 0.0
    %1648 = vmatprep.mubr.f32.mxu0 0.0
    %1649 = vmatmul.mubr.f32.gmra.mxu0 %v1579
    %v1650 = vpop.f32.mrf.mxu0
    %v1651 = vadd.f32 %v1576, %v1650
    %v1652 = vpop.f32.mrf.mxu0
    %1653 = vmatprep.mubr.f32.mxu0 0.0
    %1654 = vmatmul.mubr.f32.gmra.mxu0 %v1582
    %v1655 = vpop.f32.mrf.mxu0
    %v1656 = vadd.f32 %v1576, %v1655
    %v1657 = vpop.f32.mrf.mxu0
    %1658 = vdwg.mxu0
    %1659 = vst.msk [vmem:[#allocation9] sm:$0xff] %vm126, %v1651
    %1660 = vst.msk [vmem:[#allocation9 + $0x8] sm:$0xff] %vm126, %v1656
    // Predicated region
    $region34: #{tpu_custom_call.1} parent=1 // pred_check
      _
    $region35: #{tpu_custom_call.1} parent=1 // pred_check_branch
      %1662 = sbr.rel (0) target = $region37
    $region36: #{tpu_custom_call.1} parent=1 // pred_region
      %s1664 = ssub.s32 256, 256
      %1665 = vsyncadd [#allocation5], %s1664
      %s1666 = sshll.u32 [#allocation9], 4
      %s1667 = int_to_ptr.vmem [resolvable:$true] %s1666
      %1672 = dma.vmem_to_hbm [thread:$0]  %s1667, 256, %s5, [#allocation5], 128, 128, 8
    $region37: #{tpu_custom_call.1} parent=1 // pred_fallthru
      _
    // Predicated region
    $region38: #{tpu_custom_call.1} parent=1 // pred_check
      _
    $region39: #{tpu_custom_call.1} parent=1 // pred_check_branch
      %1674 = sbr.rel (0) target = $region41
    $region40: #{tpu_custom_call.1} parent=1 // pred_region
      %1675 = dma.done [#allocation5], 256
    $region41: #{tpu_custom_call.1} parent=1 // pred_fallthru
      _
    %1676 = vsyncpa [#allocation4], 1
    %1677 = vsyncpa [#allocation7], 1
    %1678 = vsyncpa [#allocation5], 1

</llo_original>
